<compile_context>
chip_gen: v6e
topology: v6e:2x2x1
jax: 0.10.0
libtpu: 0.0.40
codegen_flags: <defaults>
</compile_context>

<pallas_src>
import math
from functools import partial

import jax
import jax.numpy as jnp
from jax.experimental import pallas as pl
from jax.experimental.pallas import tpu as pltpu


# -----------------------------------------------------------------------------
# Config (small, deterministic)
# -----------------------------------------------------------------------------
class Params:
    dim = 64
    n_heads = 4
    n_kv_heads = 2
    n_layers = 2
    vocab_size = 64
    intermediate_size = 128
    model_parallel_size = 1
    norm_eps = 1e-6
    max_seq_len = 16


# -----------------------------------------------------------------------------
# Fused whole-stack kernel: grid=(n_layers,), activation resident in VMEM
# -----------------------------------------------------------------------------
def _make_stack_kernel(*, Hq, Hkv, Dh, Hid, eps, n_layers):
    n_rep = Hq // Hkv
    half = Dh // 2
    bf16 = jnp.bfloat16
    f32 = jnp.float32

    def rot_half(u):
        # de-interleaved [re | im] per-head layout -> [im | re]
        return jnp.concatenate([u[:, half:], u[:, :half]], axis=1)

    def kernel(x_ref, anw_ref, wqkv_ref, wo_ref, fnw_ref, w13_ref, w2_ref,
               cq_ref, sq_ref, ck_ref, sk_ref, mask_ref, o_ref, h_ref):
        layer = pl.program_id(0)

        # Seed the running activation from the embedding on the first layer.
        @pl.when(layer == 0)
        def _():
            h_ref[...] = x_ref[...]

        x = h_ref[...]                                            # (B*S, D) f32

        # -------- attention RMSNorm (fused) --------
        ms = jnp.mean(x * x, axis=-1, keepdims=True)
        xn = x * jax.lax.rsqrt(ms + eps) * anw_ref[...]

        # -------- fused QKV projection (single lane-dense matmul) --------
        qkv = jnp.dot(xn.astype(bf16), wqkv_ref[...],
                      preferred_element_type=f32)                 # (B*S, (Hq+2*Hkv)*Dh)
        q = qkv[:, : Hq * Dh]
        k = qkv[:, Hq * Dh: (Hq + Hkv) * Dh]
        v = qkv[:, (Hq + Hkv) * Dh:]

        cq, sq = cq_ref[...], sq_ref[...]      # q tables carry the 1/sqrt(Dh) scale
        ck, sk = ck_ref[...], sk_ref[...]
        mask = mask_ref[...]                   # (B*S, B*S) block-diagonal causal

        # -------- RoPE on K / gather V per kv head --------
        k_rot, v_heads = [], []
        for g in range(Hkv):
            kg = k[:, g * Dh:(g + 1) * Dh]
            k_rot.append(kg * ck + rot_half(kg) * sk)
            v_heads.append(v[:, g * Dh:(g + 1) * Dh])

        # -------- per-head attention (GQA: kv head = head // n_rep) --------
        head_outs = []
        for hh in range(Hq):
            g = hh // n_rep
            qh = q[:, hh * Dh:(hh + 1) * Dh]
            qh = qh * cq + rot_half(qh) * sq                      # RoPE + score scale
            s = jnp.einsum("qd,kd->qk", qh, k_rot[g],
                           preferred_element_type=f32) + mask     # (B*S, B*S)
            m = jnp.max(s, axis=-1, keepdims=True)
            e = jnp.exp(s - m)
            denom = jnp.sum(e, axis=-1, keepdims=True)
            pmat = e * pl.reciprocal(denom, approx=True)
            head_outs.append(jnp.dot(pmat, v_heads[g],
                                     preferred_element_type=f32))  # (B*S, Dh)
        attn = jnp.concatenate(head_outs, axis=1)                  # (B*S, Hq*Dh)

        # -------- output projection + residual --------
        h1 = x + jnp.dot(attn.astype(bf16), wo_ref[...],
                         preferred_element_type=f32)

        # -------- FFN RMSNorm (fused) + SwiGLU (w1|w3 fused) --------
        ms2 = jnp.mean(h1 * h1, axis=-1, keepdims=True)
        hn = (h1 * jax.lax.rsqrt(ms2 + eps) * fnw_ref[...]).astype(bf16)
        h13 = jnp.dot(hn, w13_ref[...], preferred_element_type=f32)  # (B*S, 2*Hid)
        g1 = h13[:, :Hid]
        g3 = h13[:, Hid:]
        act = (g1 * jax.nn.sigmoid(g1) * g3).astype(bf16)
        ffn = jnp.dot(act, w2_ref[...], preferred_element_type=f32)

        h_new = h1 + ffn
        h_ref[...] = h_new       # persists across grid steps (layer -> layer)
        o_ref[...] = h_new       # constant out-block index: written back once

    return kernel


def transformer_stack(x, sw, cos_q, sin_q, cos_k, sin_k, mask, p):
    BS, D = x.shape
    L = p.n_layers
    Hq, Hkv = p.n_heads, p.n_kv_heads
    Dh = D // Hq
    Hid = p.intermediate_size // p.model_parallel_size
    Wqkv = (Hq + 2 * Hkv) * Dh

    kernel = _make_stack_kernel(Hq=Hq, Hkv=Hkv, Dh=Dh, Hid=Hid,
                                eps=p.norm_eps, n_layers=L)

    def rep2(shape):                      # replicated (layer-invariant) 2-D input
        return pl.BlockSpec(shape, lambda l: (0, 0))

    def per_layer(s1, s2):                # per-layer slice of a stacked weight
        return pl.BlockSpec((None, s1, s2), lambda l: (l, 0, 0))

    return pl.pallas_call(
        kernel,
        out_shape=jax.ShapeDtypeStruct((BS, D), jnp.float32),
        grid=(L,),
        in_specs=[
            rep2((BS, D)),                  # embeddings (read at layer 0 only)
            per_layer(1, D),                # attn_norm
            per_layer(D, Wqkv),             # wqkv
            per_layer(Hq * Dh, D),          # wo
            per_layer(1, D),                # ffn_norm
            per_layer(D, 2 * Hid),          # w13
            per_layer(Hid, D),              # w2
            rep2((BS, Dh)), rep2((BS, Dh)),  # cos_q, sin_q
            rep2((BS, Dh)), rep2((BS, Dh)),  # cos_k, sin_k
            rep2((BS, BS)),                 # mask
        ],
        out_specs=pl.BlockSpec((BS, D), lambda l: (0, 0)),
        scratch_shapes=[pltpu.VMEM((BS, D), jnp.float32)],
        compiler_params=pltpu.CompilerParams(
            dimension_semantics=("arbitrary",)),
    )(x, sw["attn_norm"], sw["wqkv"], sw["wo"], sw["ffn_norm"],
      sw["w13"], sw["w2"], cos_q, sin_q, cos_k, sin_k, mask)


# -----------------------------------------------------------------------------
# Fused final RMSNorm + LM head (tiled over the vocab axis)
# -----------------------------------------------------------------------------
def _make_head_kernel(eps):
    def kernel(x_ref, nw_ref, w_ref, o_ref):
        x = x_ref[...]
        ms = jnp.mean(x * x, axis=-1, keepdims=True)
        xn = (x * jax.lax.rsqrt(ms + eps) * nw_ref[...]).astype(w_ref.dtype)
        o_ref[...] = jnp.dot(xn, w_ref[...], preferred_element_type=jnp.float32)
    return kernel


def lm_head(x, norm_w, w_out, eps, tile_n=512):
    M, D = x.shape
    N = w_out.shape[1]
    tn = min(tile_n, N)
    return pl.pallas_call(
        _make_head_kernel(eps),
        out_shape=jax.ShapeDtypeStruct((M, N), jnp.float32),
        grid=(pl.cdiv(N, tn),),
        in_specs=[pl.BlockSpec((M, D), lambda j: (0, 0)),
                  pl.BlockSpec((1, D), lambda j: (0, 0)),
                  pl.BlockSpec((D, tn), lambda j: (0, j))],
        out_specs=pl.BlockSpec((M, tn), lambda j: (0, j)),
        compiler_params=pltpu.CompilerParams(dimension_semantics=("parallel",)),
    )(x, norm_w, w_out)


# -----------------------------------------------------------------------------
# Plain-JAX glue: RoPE tables, mask, embedding gather, forward
# -----------------------------------------------------------------------------
def precompute_freqs(dim, end, theta=10000.0):
    freqs = 1.0 / theta ** (jnp.arange(0, dim, 2)[: dim // 2].astype(jnp.float32) / dim)
    t = jnp.arange(end, dtype=jnp.float32)
    f = jnp.outer(t, freqs)
    return jnp.cos(f), jnp.sin(f)


def transformer_forward(tokens, start_pos, weights, freqs_cos, freqs_sin, p):
    B, S = tokens.shape
    D = p.dim
    Dh = D // p.n_heads

    h = jnp.take(weights["tok_emb"], tokens, axis=0).reshape(B * S, D)

    # RoPE tables in de-interleaved [re | im] layout; q tables carry 1/sqrt(Dh).
    c = freqs_cos[start_pos:start_pos + S]                        # (S, Dh//2)
    s = freqs_sin[start_pos:start_pos + S]
    cos_k = jnp.tile(jnp.concatenate([c, c], axis=1), (B, 1))     # (B*S, Dh)
    sin_k = jnp.tile(jnp.concatenate([-s, s], axis=1), (B, 1))
    inv_scale = 1.0 / math.sqrt(Dh)
    cos_q = cos_k * inv_scale
    sin_q = sin_k * inv_scale

    # Block-diagonal causal mask over the flattened (B*S) rows.
    # TODO(synk): start_pos > 0 decoding needs a KV cache (the reference forward
    # does not model one either); attention here covers the current S tokens.
    row = jnp.arange(B * S)
    same_batch = (row[:, None] // S) == (row[None, :] // S)
    causal = (row[None, :] % S) <= (row[:, None] % S)
    mask = jnp.where(same_batch & causal, 0.0, -jnp.inf).astype(jnp.float32)

    h = transformer_stack(h, weights["stack"], cos_q, sin_q, cos_k, sin_k, mask, p)
    logits = lm_head(h, weights["norm_w"], weights["out_w"], p.norm_eps)
    return logits.reshape(B, S, p.vocab_size)


# -----------------------------------------------------------------------------
# Deterministic parameter init + one-time repacking/stacking for the kernels
# -----------------------------------------------------------------------------
def init_weights(key, p):
    head_dim = p.dim // p.n_heads
    hidden = p.intermediate_size // p.model_parallel_size
    keys = jax.random.split(key, 2 + p.n_layers)

    def norm(k, shape):
        return jax.random.normal(k, shape, jnp.float32) * 0.02

    w = {
        "tok_emb": norm(keys[0], (p.vocab_size, p.dim)),
        "out_w": norm(keys[1], (p.dim, p.vocab_size)),
        "norm_w": jnp.ones((p.dim,), jnp.float32),
        "layers": [],
    }
    for i in range(p.n_layers):
        lk = jax.random.split(keys[2 + i], 7)
        w["layers"].append({
            "wq": norm(lk[0], (p.dim, p.n_heads * head_dim)),
            "wk": norm(lk[1], (p.dim, p.n_kv_heads * head_dim)),
            "wv": norm(lk[2], (p.dim, p.n_kv_heads * head_dim)),
            "wo": norm(lk[3], (p.n_heads * head_dim, p.dim)),
            "w1": norm(lk[4], (p.dim, hidden)),
            "w2": norm(lk[5], (hidden, p.dim)),
            "w3": norm(lk[6], (p.dim, hidden)),
            "attn_norm": jnp.ones((p.dim,), jnp.float32),
            "ffn_norm": jnp.ones((p.dim,), jnp.float32),
        })
    return w


def _deinterleave_perm(n_heads, head_dim):
    # per head: [0,2,4,...,Dh-2, 1,3,...,Dh-1]  (interleaved pairs -> [re | im])
    idx = []
    for h in range(n_heads):
        base = h * head_dim
        idx += [base + 2 * j for j in range(head_dim // 2)]
        idx += [base + 2 * j + 1 for j in range(head_dim // 2)]
    return jnp.asarray(idx, dtype=jnp.int32)


def prepare_weights(w, p):
    """One-time repack: fuse QKV and w1|w3, de-interleave RoPE columns of
    wq/wk (scores are invariant since q and k get the same per-head column
    permutation), cast matmul weights to bf16, reshape norm weights to (1,D),
    and stack per-layer weights along a leading layer axis so the whole stack
    runs as one pallas_call with grid=(n_layers,)."""
    Dh = p.dim // p.n_heads
    perm_q = _deinterleave_perm(p.n_heads, Dh)
    perm_k = _deinterleave_perm(p.n_kv_heads, Dh)

    attn_norm, ffn_norm, wqkv, wo, w13, w2 = [], [], [], [], [], []
    for lw in w["layers"]:
        wqkv.append(jnp.concatenate(
            [lw["wq"][:, perm_q], lw["wk"][:, perm_k], lw["wv"]], axis=1))
        w13.append(jnp.concatenate([lw["w1"], lw["w3"]], axis=1))
        wo.append(lw["wo"])
        w2.append(lw["w2"])
        attn_norm.append(lw["attn_norm"].reshape(1, -1))
        ffn_norm.append(lw["ffn_norm"].reshape(1, -1))

    stack = {
        "attn_norm": jnp.stack(attn_norm).astype(jnp.float32),   # (L, 1, D)
        "ffn_norm": jnp.stack(ffn_norm).astype(jnp.float32),     # (L, 1, D)
        "wqkv": jnp.stack(wqkv).astype(jnp.bfloat16),            # (L, D, (Hq+2Hkv)*Dh)
        "wo": jnp.stack(wo).astype(jnp.bfloat16),                # (L, Hq*Dh, D)
        "w13": jnp.stack(w13).astype(jnp.bfloat16),              # (L, D, 2*Hid)
        "w2": jnp.stack(w2).astype(jnp.bfloat16),                # (L, Hid, D)
    }
    return {
        "tok_emb": w["tok_emb"],
        "norm_w": w["norm_w"].reshape(1, -1),
        "out_w": w["out_w"].astype(jnp.bfloat16),
        "stack": stack,
    }


# -----------------------------------------------------------------------------
if __name__ == "__main__":
    p = Params()
    weights = prepare_weights(init_weights(jax.random.PRNGKey(0), p), p)
    tokens = jax.random.randint(jax.random.PRNGKey(1), (2, 8), 0, p.vocab_size)
    freqs_cos, freqs_sin = precompute_freqs(p.dim // p.n_heads, p.max_seq_len * 2)

    @partial(jax.jit, static_argnames=("start_pos",))
    def run(tokens, weights, freqs_cos, freqs_sin, start_pos):
        return transformer_forward(tokens, start_pos, weights, freqs_cos,
                                   freqs_sin, p)

    out = run(tokens, weights, freqs_cos, freqs_sin, start_pos=0)
    jax.block_until_ready(out)
    assert out.shape == (2, 8, p.vocab_size) and out.dtype == jnp.float32
    print("KERNEL_OK")
</pallas_src>

<mosaic_0001>
module attributes {stable_mosaic.version = 11 : i64} {
  func.func @kernel(%arg0: i32, %arg1: memref<16x64xf32, #tpu.memory_space<vmem>>, %arg2: memref<1x64xf32, #tpu.memory_space<vmem>>, %arg3: memref<64x64xbf16, #tpu.memory_space<vmem>>, %arg4: memref<16x64xf32, #tpu.memory_space<vmem>>) attributes {dimension_semantics = [#tpu.dimension_semantics<parallel>], iteration_bounds = array<i64: 1>, scalar_prefetch = 0 : i64, scratch_operands = 0 : i64, tpu.core_type = #tpu.core_type<tc>, window_params = [{pipeline_mode = #tpu.pipeline_mode<synchronous>, transform_indices = @transform_0, window_bounds = array<i64: 16, 64>}, {pipeline_mode = #tpu.pipeline_mode<synchronous>, transform_indices = @transform_1, window_bounds = array<i64: 1, 64>}, {transform_indices = @transform_2, window_bounds = array<i64: 64, 64>}, {transform_indices = @transform_3, window_bounds = array<i64: 16, 64>}]} {
    %c0 = arith.constant 0 : index
    %c0_0 = arith.constant 0 : index
    %0 = vector.load %arg1[%c0, %c0_0] : memref<16x64xf32, #tpu.memory_space<vmem>>, vector<16x64xf32>
    %1 = arith.mulf %0, %0 : vector<16x64xf32>
    %cst = arith.constant dense<0.000000e+00> : vector<16xf32>
    %2 = vector.multi_reduction <add>, %1, %cst [1] : vector<16x64xf32> to vector<16xf32>
    %3 = vector.shape_cast %2 : vector<16xf32> to vector<16x1xf32>
    %cst_1 = arith.constant 6.400000e+01 : f32
    %4 = vector.broadcast %cst_1 : f32 to vector<16x1xf32>
    %5 = arith.divf %3, %4 : vector<16x1xf32>
    %cst_2 = arith.constant 9.99999997E-7 : f32
    %6 = vector.broadcast %cst_2 : f32 to vector<16x1xf32>
    %7 = arith.addf %5, %6 : vector<16x1xf32>
    %8 = math.rsqrt %7 : vector<16x1xf32>
    %9 = vector.broadcast %8 : vector<16x1xf32> to vector<16x64xf32>
    %10 = arith.mulf %0, %9 : vector<16x64xf32>
    %c0_3 = arith.constant 0 : index
    %c0_4 = arith.constant 0 : index
    %11 = vector.load %arg2[%c0_3, %c0_4] : memref<1x64xf32, #tpu.memory_space<vmem>>, vector<1x64xf32>
    %12 = vector.broadcast %11 : vector<1x64xf32> to vector<16x64xf32>
    %13 = arith.mulf %10, %12 : vector<16x64xf32>
    %14 = arith.truncf %13 : vector<16x64xf32> to vector<16x64xbf16>
    %c0_5 = arith.constant 0 : index
    %c0_6 = arith.constant 0 : index
    %15 = vector.load %arg3[%c0_5, %c0_6] : memref<64x64xbf16, #tpu.memory_space<vmem>>, vector<64x64xbf16>
    %cst_7 = arith.constant dense<0.000000e+00> : vector<16x64xf32>
    %16 = tpu.matmul %14, %15, %cst_7 {dimension_numbers = #tpu.dot_dimension_numbers<[1], [0], [0], [1], [0, 0, 1, 1], [], []>} : vector<16x64xbf16>, vector<64x64xbf16>, vector<16x64xf32> -> vector<16x64xf32>
    %c0_8 = arith.constant 0 : index
    %c0_9 = arith.constant 0 : index
    %17 = vector.load %arg4[%c0_8, %c0_9] : memref<16x64xf32, #tpu.memory_space<vmem>>, vector<16x64xf32>
    tpu.vector_store %arg4[%c0_8, %c0_9], %16 {strides = array<i32>} : memref<16x64xf32, #tpu.memory_space<vmem>>, vector<16x64xf32>,
    return
  }
  func.func @transform_0(%arg0: i32) -> (i32, i32) {
    %c0_i32 = arith.constant 0 : i32
    %c0_i32_0 = arith.constant 0 : i32
    %c0_i32_1 = arith.constant 0 : i32
    return %c0_i32, %c0_i32_0 : i32, i32
  }
  func.func @transform_1(%arg0: i32) -> (i32, i32) {
    %c0_i32 = arith.constant 0 : i32
    %c0_i32_0 = arith.constant 0 : i32
    %c0_i32_1 = arith.constant 0 : i32
    return %c0_i32, %c0_i32_0 : i32, i32
  }
  func.func @transform_2(%arg0: i32) -> (i32, i32) {
    %c0_i32 = arith.constant 0 : i32
    %c0_i32_0 = arith.constant 0 : i32
    return %c0_i32, %arg0 : i32, i32
  }
  func.func @transform_3(%arg0: i32) -> (i32, i32) {
    %c0_i32 = arith.constant 0 : i32
    %c0_i32_0 = arith.constant 0 : i32
    return %c0_i32, %arg0 : i32, i32
  }
}

module attributes {stable_mosaic.version = 11 : i64} {
  func.func @kernel(%arg0: i32, %arg1: memref<16x64xf32, #tpu.memory_space<vmem>>, %arg2: memref<1x1x64xf32, #tpu.memory_space<vmem>>, %arg3: memref<1x64x128xbf16, #tpu.memory_space<vmem>>, %arg4: memref<1x64x64xbf16, #tpu.memory_space<vmem>>, %arg5: memref<1x1x64xf32, #tpu.memory_space<vmem>>, %arg6: memref<1x64x256xbf16, #tpu.memory_space<vmem>>, %arg7: memref<1x128x64xbf16, #tpu.memory_space<vmem>>, %arg8: memref<16x16xf32, #tpu.memory_space<vmem>>, %arg9: memref<16x16xf32, #tpu.memory_space<vmem>>, %arg10: memref<16x16xf32, #tpu.memory_space<vmem>>, %arg11: memref<16x16xf32, #tpu.memory_space<vmem>>, %arg12: memref<16x16xf32, #tpu.memory_space<vmem>>, %arg13: memref<16x64xf32, #tpu.memory_space<vmem>>, %arg14: memref<16x64xf32, #tpu.memory_space<vmem>>) attributes {dimension_semantics = [#tpu.dimension_semantics<arbitrary>], iteration_bounds = array<i64: 2>, scalar_prefetch = 0 : i64, scratch_operands = 1 : i64, tpu.core_type = #tpu.core_type<tc>, window_params = [{pipeline_mode = #tpu.pipeline_mode<synchronous>, transform_indices = @transform_0, window_bounds = array<i64: 16, 64>}, {transform_indices = @transform_1, window_bounds = array<i64: 1, 1, 64>}, {transform_indices = @transform_2, window_bounds = array<i64: 1, 64, 128>}, {transform_indices = @transform_3, window_bounds = array<i64: 1, 64, 64>}, {transform_indices = @transform_4, window_bounds = array<i64: 1, 1, 64>}, {transform_indices = @transform_5, window_bounds = array<i64: 1, 64, 256>}, {transform_indices = @transform_6, window_bounds = array<i64: 1, 128, 64>}, {pipeline_mode = #tpu.pipeline_mode<synchronous>, transform_indices = @transform_7, window_bounds = array<i64: 16, 16>}, {pipeline_mode = #tpu.pipeline_mode<synchronous>, transform_indices = @transform_8, window_bounds = array<i64: 16, 16>}, {pipeline_mode = #tpu.pipeline_mode<synchronous>, transform_indices = @transform_9, window_bounds = array<i64: 16, 16>}, {pipeline_mode = #tpu.pipeline_mode<synchronous>, transform_indices = @transform_10, window_bounds = array<i64: 16, 16>}, {pipeline_mode = #tpu.pipeline_mode<synchronous>, transform_indices = @transform_11, window_bounds = array<i64: 16, 16>}, {pipeline_mode = #tpu.pipeline_mode<synchronous>, transform_indices = @transform_12, window_bounds = array<i64: 16, 64>}]} {
    %c0_i32 = arith.constant 0 : i32
    %0 = arith.cmpi eq, %arg0, %c0_i32 : i32
    %1 = arith.extui %0 : i1 to i32
    %c0_i32_0 = arith.constant 0 : i32
    %2 = arith.cmpi ne, %1, %c0_i32_0 : i32
    scf.if %2 {
      %c0_60 = arith.constant 0 : index
      %c0_61 = arith.constant 0 : index
      %166 = vector.load %arg1[%c0_60, %c0_61] : memref<16x64xf32, #tpu.memory_space<vmem>>, vector<16x64xf32>
      %c0_62 = arith.constant 0 : index
      %c0_63 = arith.constant 0 : index
      %167 = vector.load %arg14[%c0_62, %c0_63] : memref<16x64xf32, #tpu.memory_space<vmem>>, vector<16x64xf32>
      tpu.vector_store %arg14[%c0_62, %c0_63], %166 {strides = array<i32>} : memref<16x64xf32, #tpu.memory_space<vmem>>, vector<16x64xf32>,
    } else {
    }
    %c0 = arith.constant 0 : index
    %c0_1 = arith.constant 0 : index
    %3 = vector.load %arg14[%c0, %c0_1] : memref<16x64xf32, #tpu.memory_space<vmem>>, vector<16x64xf32>
    %4 = arith.mulf %3, %3 : vector<16x64xf32>
    %cst = arith.constant dense<0.000000e+00> : vector<16xf32>
    %5 = vector.multi_reduction <add>, %4, %cst [1] : vector<16x64xf32> to vector<16xf32>
    %6 = vector.shape_cast %5 : vector<16xf32> to vector<16x1xf32>
    %cst_2 = arith.constant 6.400000e+01 : f32
    %7 = vector.broadcast %cst_2 : f32 to vector<16x1xf32>
    %8 = arith.divf %6, %7 : vector<16x1xf32>
    %cst_3 = arith.constant 9.99999997E-7 : f32
    %9 = vector.broadcast %cst_3 : f32 to vector<16x1xf32>
    %10 = arith.addf %8, %9 : vector<16x1xf32>
    %11 = math.rsqrt %10 : vector<16x1xf32>
    %12 = vector.broadcast %11 : vector<16x1xf32> to vector<16x64xf32>
    %13 = arith.mulf %3, %12 : vector<16x64xf32>
    %c0_4 = arith.constant 0 : index
    %c0_5 = arith.constant 0 : index
    %c0_6 = arith.constant 0 : index
    %14 = vector.load %arg2[%c0_4, %c0_5, %c0_6] : memref<1x1x64xf32, #tpu.memory_space<vmem>>, vector<1x1x64xf32>
    %15 = vector.shape_cast %14 : vector<1x1x64xf32> to vector<1x64xf32>
    %16 = vector.broadcast %15 : vector<1x64xf32> to vector<16x64xf32>
    %17 = arith.mulf %13, %16 : vector<16x64xf32>
    %18 = arith.truncf %17 : vector<16x64xf32> to vector<16x64xbf16>
    %c0_7 = arith.constant 0 : index
    %c0_8 = arith.constant 0 : index
    %c0_9 = arith.constant 0 : index
    %19 = vector.load %arg3[%c0_7, %c0_8, %c0_9] : memref<1x64x128xbf16, #tpu.memory_space<vmem>>, vector<1x64x128xbf16>
    %20 = vector.shape_cast %19 : vector<1x64x128xbf16> to vector<64x128xbf16>
    %cst_10 = arith.constant dense<0.000000e+00> : vector<16x128xf32>
    %21 = tpu.matmul %18, %20, %cst_10 {dimension_numbers = #tpu.dot_dimension_numbers<[1], [0], [0], [1], [0, 0, 1, 1], [], []>} : vector<16x64xbf16>, vector<64x128xbf16>, vector<16x128xf32> -> vector<16x128xf32>
    %22 = vector.extract_strided_slice %21 {offsets = [0, 0], sizes = [16, 64], strides = [1, 1]} : vector<16x128xf32> to vector<16x64xf32>
    %23 = vector.extract_strided_slice %21 {offsets = [0, 64], sizes = [16, 32], strides = [1, 1]} : vector<16x128xf32> to vector<16x32xf32>
    %24 = vector.extract_strided_slice %21 {offsets = [0, 96], sizes = [16, 32], strides = [1, 1]} : vector<16x128xf32> to vector<16x32xf32>
    %c0_11 = arith.constant 0 : index
    %c0_12 = arith.constant 0 : index
    %25 = vector.load %arg8[%c0_11, %c0_12] : memref<16x16xf32, #tpu.memory_space<vmem>>, vector<16x16xf32>
    %c0_13 = arith.constant 0 : index
    %c0_14 = arith.constant 0 : index
    %26 = vector.load %arg9[%c0_13, %c0_14] : memref<16x16xf32, #tpu.memory_space<vmem>>, vector<16x16xf32>
    %c0_15 = arith.constant 0 : index
    %c0_16 = arith.constant 0 : index
    %27 = vector.load %arg10[%c0_15, %c0_16] : memref<16x16xf32, #tpu.memory_space<vmem>>, vector<16x16xf32>
    %c0_17 = arith.constant 0 : index
    %c0_18 = arith.constant 0 : index
    %28 = vector.load %arg11[%c0_17, %c0_18] : memref<16x16xf32, #tpu.memory_space<vmem>>, vector<16x16xf32>
    %c0_19 = arith.constant 0 : index
    %c0_20 = arith.constant 0 : index
    %29 = vector.load %arg12[%c0_19, %c0_20] : memref<16x16xf32, #tpu.memory_space<vmem>>, vector<16x16xf32>
    %30 = vector.extract_strided_slice %23 {offsets = [0, 0], sizes = [16, 16], strides = [1, 1]} : vector<16x32xf32> to vector<16x16xf32>
    %31 = arith.mulf %30, %27 : vector<16x16xf32>
    %32 = vector.extract_strided_slice %30 {offsets = [0, 8], sizes = [16, 8], strides = [1, 1]} : vector<16x16xf32> to vector<16x8xf32>
    %33 = vector.extract_strided_slice %30 {offsets = [0, 0], sizes = [16, 8], strides = [1, 1]} : vector<16x16xf32> to vector<16x8xf32>
    %34 = tpu.concatenate %32, %33 in 1 : vector<16x8xf32>, vector<16x8xf32> -> vector<16x16xf32>
    %35 = arith.mulf %34, %28 : vector<16x16xf32>
    %36 = arith.addf %31, %35 : vector<16x16xf32>
    %37 = vector.extract_strided_slice %24 {offsets = [0, 0], sizes = [16, 16], strides = [1, 1]} : vector<16x32xf32> to vector<16x16xf32>
    %38 = vector.extract_strided_slice %23 {offsets = [0, 16], sizes = [16, 16], strides = [1, 1]} : vector<16x32xf32> to vector<16x16xf32>
    %39 = arith.mulf %38, %27 : vector<16x16xf32>
    %40 = vector.extract_strided_slice %38 {offsets = [0, 8], sizes = [16, 8], strides = [1, 1]} : vector<16x16xf32> to vector<16x8xf32>
    %41 = vector.extract_strided_slice %38 {offsets = [0, 0], sizes = [16, 8], strides = [1, 1]} : vector<16x16xf32> to vector<16x8xf32>
    %42 = tpu.concatenate %40, %41 in 1 : vector<16x8xf32>, vector<16x8xf32> -> vector<16x16xf32>
    %43 = arith.mulf %42, %28 : vector<16x16xf32>
    %44 = arith.addf %39, %43 : vector<16x16xf32>
    %45 = vector.extract_strided_slice %24 {offsets = [0, 16], sizes = [16, 16], strides = [1, 1]} : vector<16x32xf32> to vector<16x16xf32>
    %46 = vector.extract_strided_slice %22 {offsets = [0, 0], sizes = [16, 16], strides = [1, 1]} : vector<16x64xf32> to vector<16x16xf32>
    %47 = arith.mulf %46, %25 : vector<16x16xf32>
    %48 = vector.extract_strided_slice %46 {offsets = [0, 8], sizes = [16, 8], strides = [1, 1]} : vector<16x16xf32> to vector<16x8xf32>
    %49 = vector.extract_strided_slice %46 {offsets = [0, 0], sizes = [16, 8], strides = [1, 1]} : vector<16x16xf32> to vector<16x8xf32>
    %50 = tpu.concatenate %48, %49 in 1 : vector<16x8xf32>, vector<16x8xf32> -> vector<16x16xf32>
    %51 = arith.mulf %50, %26 : vector<16x16xf32>
    %52 = arith.addf %47, %51 : vector<16x16xf32>
    "tpu.trace_start"() <{level = 10 : i32, message = "qd,kd->qk"}> : () -> ()
    %cst_21 = arith.constant dense<0.000000e+00> : vector<16x16xf32>
    %53 = tpu.matmul %52, %36, %cst_21 {dimension_numbers = #tpu.dot_dimension_numbers<[1], [1], [0], [0], [0, 0, 1, 0], [], []>} : vector<16x16xf32>, vector<16x16xf32>, vector<16x16xf32> -> vector<16x16xf32>
    "tpu.trace_stop"() : () -> ()
    %54 = arith.addf %53, %29 : vector<16x16xf32>
    %cst_22 = arith.constant dense<0xFF800000> : vector<16xf32>
    %55 = vector.multi_reduction <maximumf>, %54, %cst_22 [1] : vector<16x16xf32> to vector<16xf32>
    %56 = vector.shape_cast %55 : vector<16xf32> to vector<16x1xf32>
    %57 = vector.broadcast %56 : vector<16x1xf32> to vector<16x16xf32>
    %58 = arith.subf %54, %57 : vector<16x16xf32>
    %59 = math.exp %58 : vector<16x16xf32>
    %cst_23 = arith.constant dense<0.000000e+00> : vector<16xf32>
    %60 = vector.multi_reduction <add>, %59, %cst_23 [1] : vector<16x16xf32> to vector<16xf32>
    %61 = vector.shape_cast %60 : vector<16xf32> to vector<16x1xf32>
    %62 = tpu.reciprocal %61 {approx = true} : vector<16x1xf32> -> vector<16x1xf32>
    %63 = vector.broadcast %62 : vector<16x1xf32> to vector<16x16xf32>
    %64 = arith.mulf %59, %63 : vector<16x16xf32>
    %cst_24 = arith.constant dense<0.000000e+00> : vector<16x16xf32>
    %65 = tpu.matmul %64, %37, %cst_24 {dimension_numbers = #tpu.dot_dimension_numbers<[1], [0], [0], [1], [0, 0, 1, 1], [], []>} : vector<16x16xf32>, vector<16x16xf32>, vector<16x16xf32> -> vector<16x16xf32>
    %66 = vector.extract_strided_slice %22 {offsets = [0, 16], sizes = [16, 16], strides = [1, 1]} : vector<16x64xf32> to vector<16x16xf32>
    %67 = arith.mulf %66, %25 : vector<16x16xf32>
    %68 = vector.extract_strided_slice %66 {offsets = [0, 8], sizes = [16, 8], strides = [1, 1]} : vector<16x16xf32> to vector<16x8xf32>
    %69 = vector.extract_strided_slice %66 {offsets = [0, 0], sizes = [16, 8], strides = [1, 1]} : vector<16x16xf32> to vector<16x8xf32>
    %70 = tpu.concatenate %68, %69 in 1 : vector<16x8xf32>, vector<16x8xf32> -> vector<16x16xf32>
    %71 = arith.mulf %70, %26 : vector<16x16xf32>
    %72 = arith.addf %67, %71 : vector<16x16xf32>
    "tpu.trace_start"() <{level = 10 : i32, message = "qd,kd->qk"}> : () -> ()
    %cst_25 = arith.constant dense<0.000000e+00> : vector<16x16xf32>
    %73 = tpu.matmul %72, %36, %cst_25 {dimension_numbers = #tpu.dot_dimension_numbers<[1], [1], [0], [0], [0, 0, 1, 0], [], []>} : vector<16x16xf32>, vector<16x16xf32>, vector<16x16xf32> -> vector<16x16xf32>
    "tpu.trace_stop"() : () -> ()
    %74 = arith.addf %73, %29 : vector<16x16xf32>
    %cst_26 = arith.constant dense<0xFF800000> : vector<16xf32>
    %75 = vector.multi_reduction <maximumf>, %74, %cst_26 [1] : vector<16x16xf32> to vector<16xf32>
    %76 = vector.shape_cast %75 : vector<16xf32> to vector<16x1xf32>
    %77 = vector.broadcast %76 : vector<16x1xf32> to vector<16x16xf32>
    %78 = arith.subf %74, %77 : vector<16x16xf32>
    %79 = math.exp %78 : vector<16x16xf32>
    %cst_27 = arith.constant dense<0.000000e+00> : vector<16xf32>
    %80 = vector.multi_reduction <add>, %79, %cst_27 [1] : vector<16x16xf32> to vector<16xf32>
    %81 = vector.shape_cast %80 : vector<16xf32> to vector<16x1xf32>
    %82 = tpu.reciprocal %81 {approx = true} : vector<16x1xf32> -> vector<16x1xf32>
    %83 = vector.broadcast %82 : vector<16x1xf32> to vector<16x16xf32>
    %84 = arith.mulf %79, %83 : vector<16x16xf32>
    %cst_28 = arith.constant dense<0.000000e+00> : vector<16x16xf32>
    %85 = tpu.matmul %84, %37, %cst_28 {dimension_numbers = #tpu.dot_dimension_numbers<[1], [0], [0], [1], [0, 0, 1, 1], [], []>} : vector<16x16xf32>, vector<16x16xf32>, vector<16x16xf32> -> vector<16x16xf32>
    %86 = vector.extract_strided_slice %22 {offsets = [0, 32], sizes = [16, 16], strides = [1, 1]} : vector<16x64xf32> to vector<16x16xf32>
    %87 = arith.mulf %86, %25 : vector<16x16xf32>
    %88 = vector.extract_strided_slice %86 {offsets = [0, 8], sizes = [16, 8], strides = [1, 1]} : vector<16x16xf32> to vector<16x8xf32>
    %89 = vector.extract_strided_slice %86 {offsets = [0, 0], sizes = [16, 8], strides = [1, 1]} : vector<16x16xf32> to vector<16x8xf32>
    %90 = tpu.concatenate %88, %89 in 1 : vector<16x8xf32>, vector<16x8xf32> -> vector<16x16xf32>
    %91 = arith.mulf %90, %26 : vector<16x16xf32>
    %92 = arith.addf %87, %91 : vector<16x16xf32>
    "tpu.trace_start"() <{level = 10 : i32, message = "qd,kd->qk"}> : () -> ()
    %cst_29 = arith.constant dense<0.000000e+00> : vector<16x16xf32>
    %93 = tpu.matmul %92, %44, %cst_29 {dimension_numbers = #tpu.dot_dimension_numbers<[1], [1], [0], [0], [0, 0, 1, 0], [], []>} : vector<16x16xf32>, vector<16x16xf32>, vector<16x16xf32> -> vector<16x16xf32>
    "tpu.trace_stop"() : () -> ()
    %94 = arith.addf %93, %29 : vector<16x16xf32>
    %cst_30 = arith.constant dense<0xFF800000> : vector<16xf32>
    %95 = vector.multi_reduction <maximumf>, %94, %cst_30 [1] : vector<16x16xf32> to vector<16xf32>
    %96 = vector.shape_cast %95 : vector<16xf32> to vector<16x1xf32>
    %97 = vector.broadcast %96 : vector<16x1xf32> to vector<16x16xf32>
    %98 = arith.subf %94, %97 : vector<16x16xf32>
    %99 = math.exp %98 : vector<16x16xf32>
    %cst_31 = arith.constant dense<0.000000e+00> : vector<16xf32>
    %100 = vector.multi_reduction <add>, %99, %cst_31 [1] : vector<16x16xf32> to vector<16xf32>
    %101 = vector.shape_cast %100 : vector<16xf32> to vector<16x1xf32>
    %102 = tpu.reciprocal %101 {approx = true} : vector<16x1xf32> -> vector<16x1xf32>
    %103 = vector.broadcast %102 : vector<16x1xf32> to vector<16x16xf32>
    %104 = arith.mulf %99, %103 : vector<16x16xf32>
    %cst_32 = arith.constant dense<0.000000e+00> : vector<16x16xf32>
    %105 = tpu.matmul %104, %45, %cst_32 {dimension_numbers = #tpu.dot_dimension_numbers<[1], [0], [0], [1], [0, 0, 1, 1], [], []>} : vector<16x16xf32>, vector<16x16xf32>, vector<16x16xf32> -> vector<16x16xf32>
    %106 = vector.extract_strided_slice %22 {offsets = [0, 48], sizes = [16, 16], strides = [1, 1]} : vector<16x64xf32> to vector<16x16xf32>
    %107 = arith.mulf %106, %25 : vector<16x16xf32>
    %108 = vector.extract_strided_slice %106 {offsets = [0, 8], sizes = [16, 8], strides = [1, 1]} : vector<16x16xf32> to vector<16x8xf32>
    %109 = vector.extract_strided_slice %106 {offsets = [0, 0], sizes = [16, 8], strides = [1, 1]} : vector<16x16xf32> to vector<16x8xf32>
    %110 = tpu.concatenate %108, %109 in 1 : vector<16x8xf32>, vector<16x8xf32> -> vector<16x16xf32>
    %111 = arith.mulf %110, %26 : vector<16x16xf32>
    %112 = arith.addf %107, %111 : vector<16x16xf32>
    "tpu.trace_start"() <{level = 10 : i32, message = "qd,kd->qk"}> : () -> ()
    %cst_33 = arith.constant dense<0.000000e+00> : vector<16x16xf32>
    %113 = tpu.matmul %112, %44, %cst_33 {dimension_numbers = #tpu.dot_dimension_numbers<[1], [1], [0], [0], [0, 0, 1, 0], [], []>} : vector<16x16xf32>, vector<16x16xf32>, vector<16x16xf32> -> vector<16x16xf32>
    "tpu.trace_stop"() : () -> ()
    %114 = arith.addf %113, %29 : vector<16x16xf32>
    %cst_34 = arith.constant dense<0xFF800000> : vector<16xf32>
    %115 = vector.multi_reduction <maximumf>, %114, %cst_34 [1] : vector<16x16xf32> to vector<16xf32>
    %116 = vector.shape_cast %115 : vector<16xf32> to vector<16x1xf32>
    %117 = vector.broadcast %116 : vector<16x1xf32> to vector<16x16xf32>
    %118 = arith.subf %114, %117 : vector<16x16xf32>
    %119 = math.exp %118 : vector<16x16xf32>
    %cst_35 = arith.constant dense<0.000000e+00> : vector<16xf32>
    %120 = vector.multi_reduction <add>, %119, %cst_35 [1] : vector<16x16xf32> to vector<16xf32>
    %121 = vector.shape_cast %120 : vector<16xf32> to vector<16x1xf32>
    %122 = tpu.reciprocal %121 {approx = true} : vector<16x1xf32> -> vector<16x1xf32>
    %123 = vector.broadcast %122 : vector<16x1xf32> to vector<16x16xf32>
    %124 = arith.mulf %119, %123 : vector<16x16xf32>
    %cst_36 = arith.constant dense<0.000000e+00> : vector<16x16xf32>
    %125 = tpu.matmul %124, %45, %cst_36 {dimension_numbers = #tpu.dot_dimension_numbers<[1], [0], [0], [1], [0, 0, 1, 1], [], []>} : vector<16x16xf32>, vector<16x16xf32>, vector<16x16xf32> -> vector<16x16xf32>
    %126 = tpu.concatenate %65, %85, %105, %125 in 1 : vector<16x16xf32>, vector<16x16xf32>, vector<16x16xf32>, vector<16x16xf32> -> vector<16x64xf32>
    %127 = arith.truncf %126 : vector<16x64xf32> to vector<16x64xbf16>
    %c0_37 = arith.constant 0 : index
    %c0_38 = arith.constant 0 : index
    %c0_39 = arith.constant 0 : index
    %128 = vector.load %arg4[%c0_37, %c0_38, %c0_39] : memref<1x64x64xbf16, #tpu.memory_space<vmem>>, vector<1x64x64xbf16>
    %129 = vector.shape_cast %128 : vector<1x64x64xbf16> to vector<64x64xbf16>
    %cst_40 = arith.constant dense<0.000000e+00> : vector<16x64xf32>
    %130 = tpu.matmul %127, %129, %cst_40 {dimension_numbers = #tpu.dot_dimension_numbers<[1], [0], [0], [1], [0, 0, 1, 1], [], []>} : vector<16x64xbf16>, vector<64x64xbf16>, vector<16x64xf32> -> vector<16x64xf32>
    %131 = arith.addf %3, %130 : vector<16x64xf32>
    %132 = arith.mulf %131, %131 : vector<16x64xf32>
    %cst_41 = arith.constant dense<0.000000e+00> : vector<16xf32>
    %133 = vector.multi_reduction <add>, %132, %cst_41 [1] : vector<16x64xf32> to vector<16xf32>
    %134 = vector.shape_cast %133 : vector<16xf32> to vector<16x1xf32>
    %cst_42 = arith.constant 6.400000e+01 : f32
    %135 = vector.broadcast %cst_42 : f32 to vector<16x1xf32>
    %136 = arith.divf %134, %135 : vector<16x1xf32>
    %cst_43 = arith.constant 9.99999997E-7 : f32
    %137 = vector.broadcast %cst_43 : f32 to vector<16x1xf32>
    %138 = arith.addf %136, %137 : vector<16x1xf32>
    %139 = math.rsqrt %138 : vector<16x1xf32>
    %140 = vector.broadcast %139 : vector<16x1xf32> to vector<16x64xf32>
    %141 = arith.mulf %131, %140 : vector<16x64xf32>
    %c0_44 = arith.constant 0 : index
    %c0_45 = arith.constant 0 : index
    %c0_46 = arith.constant 0 : index
    %142 = vector.load %arg5[%c0_44, %c0_45, %c0_46] : memref<1x1x64xf32, #tpu.memory_space<vmem>>, vector<1x1x64xf32>
    %143 = vector.shape_cast %142 : vector<1x1x64xf32> to vector<1x64xf32>
    %144 = vector.broadcast %143 : vector<1x64xf32> to vector<16x64xf32>
    %145 = arith.mulf %141, %144 : vector<16x64xf32>
    %146 = arith.truncf %145 : vector<16x64xf32> to vector<16x64xbf16>
    %c0_47 = arith.constant 0 : index
    %c0_48 = arith.constant 0 : index
    %c0_49 = arith.constant 0 : index
    %147 = vector.load %arg6[%c0_47, %c0_48, %c0_49] : memref<1x64x256xbf16, #tpu.memory_space<vmem>>, vector<1x64x256xbf16>
    %148 = vector.shape_cast %147 : vector<1x64x256xbf16> to vector<64x256xbf16>
    %cst_50 = arith.constant dense<0.000000e+00> : vector<16x256xf32>
    %149 = tpu.matmul %146, %148, %cst_50 {dimension_numbers = #tpu.dot_dimension_numbers<[1], [0], [0], [1], [0, 0, 1, 1], [], []>} : vector<16x64xbf16>, vector<64x256xbf16>, vector<16x256xf32> -> vector<16x256xf32>
    %150 = vector.extract_strided_slice %149 {offsets = [0, 0], sizes = [16, 128], strides = [1, 1]} : vector<16x256xf32> to vector<16x128xf32>
    %151 = vector.extract_strided_slice %149 {offsets = [0, 128], sizes = [16, 128], strides = [1, 1]} : vector<16x256xf32> to vector<16x128xf32>
    %152 = arith.negf %150 : vector<16x128xf32>
    %153 = math.exp %152 : vector<16x128xf32>
    %cst_51 = arith.constant 1.000000e+00 : f32
    %154 = vector.broadcast %cst_51 : f32 to vector<16x128xf32>
    %155 = arith.addf %154, %153 : vector<16x128xf32>
    %156 = arith.divf %154, %155 : vector<16x128xf32>
    %157 = arith.mulf %150, %156 : vector<16x128xf32>
    %158 = arith.mulf %157, %151 : vector<16x128xf32>
    %159 = arith.truncf %158 : vector<16x128xf32> to vector<16x128xbf16>
    %c0_52 = arith.constant 0 : index
    %c0_53 = arith.constant 0 : index
    %c0_54 = arith.constant 0 : index
    %160 = vector.load %arg7[%c0_52, %c0_53, %c0_54] : memref<1x128x64xbf16, #tpu.memory_space<vmem>>, vector<1x128x64xbf16>
    %161 = vector.shape_cast %160 : vector<1x128x64xbf16> to vector<128x64xbf16>
    %cst_55 = arith.constant dense<0.000000e+00> : vector<16x64xf32>
    %162 = tpu.matmul %159, %161, %cst_55 {dimension_numbers = #tpu.dot_dimension_numbers<[1], [0], [0], [1], [0, 0, 1, 1], [], []>} : vector<16x128xbf16>, vector<128x64xbf16>, vector<16x64xf32> -> vector<16x64xf32>
    %163 = arith.addf %131, %162 : vector<16x64xf32>
    %c0_56 = arith.constant 0 : index
    %c0_57 = arith.constant 0 : index
    %164 = vector.load %arg14[%c0_56, %c0_57] : memref<16x64xf32, #tpu.memory_space<vmem>>, vector<16x64xf32>
    tpu.vector_store %arg14[%c0_56, %c0_57], %163 {strides = array<i32>} : memref<16x64xf32, #tpu.memory_space<vmem>>, vector<16x64xf32>,
    %c0_58 = arith.constant 0 : index
    %c0_59 = arith.constant 0 : index
    %165 = vector.load %arg13[%c0_58, %c0_59] : memref<16x64xf32, #tpu.memory_space<vmem>>, vector<16x64xf32>
    tpu.vector_store %arg13[%c0_58, %c0_59], %163 {strides = array<i32>} : memref<16x64xf32, #tpu.memory_space<vmem>>, vector<16x64xf32>,
    return
  }
  func.func @transform_0(%arg0: i32) -> (i32, i32) {
    %c0_i32 = arith.constant 0 : i32
    %c0_i32_0 = arith.constant 0 : i32
    %c0_i32_1 = arith.constant 0 : i32
    return %c0_i32, %c0_i32_0 : i32, i32
  }
  func.func @transform_1(%arg0: i32) -> (i32, i32, i32) {
    %c0_i32 = arith.constant 0 : i32
    %c0_i32_0 = arith.constant 0 : i32
    %c0_i32_1 = arith.constant 0 : i32
    return %arg0, %c0_i32, %c0_i32_0 : i32, i32, i32
  }
  func.func @transform_2(%arg0: i32) -> (i32, i32, i32) {
    %c0_i32 = arith.constant 0 : i32
    %c0_i32_0 = arith.constant 0 : i32
    %c0_i32_1 = arith.constant 0 : i32
    return %arg0, %c0_i32, %c0_i32_0 : i32, i32, i32
  }
  func.func @transform_3(%arg0: i32) -> (i32, i32, i32) {
    %c0_i32 = arith.constant 0 : i32
    %c0_i32_0 = arith.constant 0 : i32
    %c0_i32_1 = arith.constant 0 : i32
    return %arg0, %c0_i32, %c0_i32_0 : i32, i32, i32
  }
  func.func @transform_4(%arg0: i32) -> (i32, i32, i32) {
    %c0_i32 = arith.constant 0 : i32
    %c0_i32_0 = arith.constant 0 : i32
    %c0_i32_1 = arith.constant 0 : i32
    return %arg0, %c0_i32, %c0_i32_0 : i32, i32, i32
  }
  func.func @transform_5(%arg0: i32) -> (i32, i32, i32) {
    %c0_i32 = arith.constant 0 : i32
    %c0_i32_0 = arith.constant 0 : i32
    %c0_i32_1 = arith.constant 0 : i32
    return %arg0, %c0_i32, %c0_i32_0 : i32, i32, i32
  }
  func.func @transform_6(%arg0: i32) -> (i32, i32, i32) {
    %c0_i32 = arith.constant 0 : i32
    %c0_i32_0 = arith.constant 0 : i32
    %c0_i32_1 = arith.constant 0 : i32
    return %arg0, %c0_i32, %c0_i32_0 : i32, i32, i32
  }
  func.func @transform_7(%arg0: i32) -> (i32, i32) {
    %c0_i32 = arith.constant 0 : i32
    %c0_i32_0 = arith.constant 0 : i32
    %c0_i32_1 = arith.constant 0 : i32
    return %c0_i32, %c0_i32_0 : i32, i32
  }
  func.func @transform_8(%arg0: i32) -> (i32, i32) {
    %c0_i32 = arith.constant 0 : i32
    %c0_i32_0 = arith.constant 0 : i32
    %c0_i32_1 = arith.constant 0 : i32
    return %c0_i32, %c0_i32_0 : i32, i32
  }
  func.func @transform_9(%arg0: i32) -> (i32, i32) {
    %c0_i32 = arith.constant 0 : i32
    %c0_i32_0 = arith.constant 0 : i32
    %c0_i32_1 = arith.constant 0 : i32
    return %c0_i32, %c0_i32_0 : i32, i32
  }
  func.func @transform_10(%arg0: i32) -> (i32, i32) {
    %c0_i32 = arith.constant 0 : i32
    %c0_i32_0 = arith.constant 0 : i32
    %c0_i32_1 = arith.constant 0 : i32
    return %c0_i32, %c0_i32_0 : i32, i32
  }
  func.func @transform_11(%arg0: i32) -> (i32, i32) {
    %c0_i32 = arith.constant 0 : i32
    %c0_i32_0 = arith.constant 0 : i32
    %c0_i32_1 = arith.constant 0 : i32
    return %c0_i32, %c0_i32_0 : i32, i32
  }
  func.func @transform_12(%arg0: i32) -> (i32, i32) {
    %c0_i32 = arith.constant 0 : i32
    %c0_i32_0 = arith.constant 0 : i32
    %c0_i32_1 = arith.constant 0 : i32
    return %c0_i32, %c0_i32_0 : i32, i32
  }
}

</mosaic_0001>

<llo_original>
// kernel: run.3
$region0: #{run.3}
  #allocation0 [shape = 'u32[]', space=smem, size = 0x4, offset = 0x4, fixed_abs, tag = 'smem constant byte address 0x4 - core index']
  #allocation1 [shape = 'u32[144,128]{1,0:T(1,128)}', space=vmem, size = 0x12000, scoped, tag = 'internal scratch']
  %s0 = inlined_call_operand.vmem [shape: f32[16,64], index: 0, kind: input, shape index: {}]
  %s1 = inlined_call_operand.vmem [shape: f32[1,64], index: 1, kind: input, shape index: {}]
  %s2 = inlined_call_operand.vmem [shape: bf16[64,64], index: 2, kind: input, shape index: {}]
  %s3 = inlined_call_operand.hbm [shape: f32[16,64], index: 3, kind: output, shape index: {}]
  %s4 = sld [smem:[#allocation0]]
  $region22: #{run.3} parent=0
    _
  %s6 = ssub.s32 1, %s4
  %s7 = scalar_select 0, %s6, %s4
  $region1: #{run.3} parent=0
    #allocation2 [shape = 'u8[8192]{0}', space=vmem, size = 0x2000, scoped, tag = 'output window, operand 0, single buffered']
    #allocation3 [shape = 's32[1]{0}', space=sflag, size = 0x4, scoped, tag = 'scoped memory for run.3']
    %8 = vsyncpa [#allocation3], 0
    // Predicated region
    $region2: #{run.3} parent=1 // pred_check
      _
    $region3: #{run.3} parent=1 // pred_check_branch
      %10 = sbr.rel (0) target = $region5
    $region4: #{run.3} parent=1 // pred_region
      _
    $region5: #{run.3} parent=1 // pred_fallthru
      _
    // Predicated region
    $region6: #{run.3} parent=1 // pred_check
      _
    $region7: #{run.3} parent=1 // pred_check_branch
      %12 = sbr.rel (0) target = $region9
    $region8: #{run.3} parent=1 // pred_region
      _
    $region9: #{run.3} parent=1 // pred_fallthru
      _
    // Predicated region
    $region10: #{run.3} parent=1 // pred_check
      _
    $region11: #{run.3} parent=1 // pred_check_branch
      %14 = sbr.rel (0) target = $region13
    $region12: #{run.3} parent=1 // pred_region
      _
    $region13: #{run.3} parent=1 // pred_fallthru
      _
    %v16 = vld [vmem:[%s0] sm:$0xff]
    %v17 = vld [vmem:[%s0 + $0x8] sm:$0xff]
    %v18 = vmul.f32 %v16, %v16
    %v19 = vmul.f32 %v17, %v17
    %vm20 = vcmask 523264
    %v21 = vsel %vm20, %v18, 0.0
    %22 = vadd.xlane.f32.xlu0 %v21
    %v23 = vpop.xlane.xlu0 %22
    %v24 = vsel %vm20, %v19, 0.0
    %25 = vadd.xlane.f32.xlu0 %v24
    %v26 = vpop.xlane.xlu0 %25
    %v27 = vrcp.pop 64.0
    %v28 = vmul.f32 %v23, %v27
    %v29 = vmul.f32 %v26, %v27
    %v30 = vadd.f32 %v28, 1e-06
    %v31 = vadd.f32 %v29, 1e-06
    %v32 = vrsqrt.pop %v30
    %v33 = vrsqrt.pop %v31
    %v34 = vmul.f32 %v16, %v32
    %v35 = vmul.f32 %v17, %v33
    %v36 = vld [vmem:[%s1] sm:$0x1]
    %v38 = vlaneseq
    %v39 = vshrl.u32 %v38, 7
    %v40 = vsub.s32 0, %v39
    %v41 = vrot.slane %v36, %v40
    %v43 = vmul.f32 %v34, %v41
    %v44 = vmul.f32 %v35, %v41
    %v45 = vpack.c.bf16 %v44, %v43
    %v46 = vld [vmem:[%s2] sm:$0xf]
    %v47 = vld [vmem:[%s2 + $0x4] sm:$0xf]
    %v48 = vld [vmem:[%s2 + $0x8] sm:$0xf]
    %v49 = vld [vmem:[%s2 + $0xc] sm:$0xf]
    %v50 = vld [vmem:[%s2 + $0x10] sm:$0xf]
    %v51 = vld [vmem:[%s2 + $0x14] sm:$0xf]
    %v52 = vld [vmem:[%s2 + $0x18] sm:$0xf]
    %v53 = vld [vmem:[%s2 + $0x1c] sm:$0xf]
    %v62 = vunpack.c.l.b16 %v46
    %v63 = vunpack.c.l.b16 %v47
    %v64 = vunpack.c.l.b16 %v48
    %v65 = vunpack.c.l.b16 %v49
    %v66 = vunpack.c.l.b16 %v50
    %v67 = vunpack.c.l.b16 %v51
    %v68 = vunpack.c.l.b16 %v52
    %v69 = vunpack.c.l.b16 %v53
    %v70 = vpack.c.b16 %v63, %v62
    %v71 = vpack.c.b16 %v65, %v64
    %v72 = vpack.c.b16 %v67, %v66
    %v73 = vpack.c.b16 %v69, %v68
    %v79 = vsel %vm20, %v45, 0
    %81 = vmatprep.subr.bf16.mxu0 0
    %82 = vmatpush1.bf16.msra.mxu0 0
    %83 = vmatprep.subr.bf16.mxu0 0
    %84 = vmatpush1.bf16.msra.mxu0 0
    %85 = vmatprep.subr.bf16.mxu0 0
    %86 = vmatpush1.bf16.msra.mxu0 0
    %87 = vmatprep.subr.bf16.mxu0 0
    %88 = vmatpush1.bf16.msra.mxu0 0
    %89 = vmatprep.subr.bf16.mxu0 0
    %90 = vmatpush1.bf16.msra.mxu0 %v73
    %91 = vmatprep.subr.bf16.mxu0 0
    %92 = vmatpush1.bf16.msra.mxu0 %v72
    %93 = vmatprep.subr.bf16.mxu0 0
    %94 = vmatpush1.bf16.msra.mxu0 %v71
    %95 = vmatprep.subr.bf16.mxu0 0
    %96 = vmatpush1.bf16.msra.mxu0 %v70
    %97 = vmatprep.subr.bf16.mxu0 0
    %98 = vmatpush2.bf16.msra.mxu0 0
    %99 = vmatprep.subr.bf16.mxu0 0
    %100 = vmatpush2.bf16.msra.mxu0 0
    %101 = vmatprep.subr.bf16.mxu0 0
    %102 = vmatpush2.bf16.msra.mxu0 0
    %103 = vmatprep.subr.bf16.mxu0 0
    %104 = vmatpush2.bf16.msra.mxu0 0
    %105 = vmatprep.subr.bf16.mxu0 0
    %106 = vmatpush2.bf16.msra.mxu0 0
    %107 = vmatprep.subr.bf16.mxu0 0
    %108 = vmatpush2.bf16.msra.mxu0 0
    %109 = vmatprep.subr.bf16.mxu0 0
    %110 = vmatpush2.bf16.msra.mxu0 0
    %111 = vmatprep.subr.bf16.mxu0 0
    %112 = vmatpush2.bf16.msra.mxu0 0
    %113 = vmatprep.mubr.bf16.mxu0 0
    %114 = vmatmul.mubr.bf16.gmra.mxu0 %v79
    %v115 = vpop.f32.mrf.mxu0
    %v116 = vadd.f32 0.0, %v115
    %v117 = vpop.f32.mrf.mxu0
    %v118 = vpop.f32.mrf.mxu0
    %v119 = vadd.f32 0.0, %v118
    %v120 = vpop.f32.mrf.mxu0
    %121 = vdwg.mxu0
    %122 = vst.msk [vmem:[#allocation2] sm:$0xff] %vm20, %v116
    %123 = vst.msk [vmem:[#allocation2 + $0x8] sm:$0xff] %vm20, %v119
    // Predicated region
    $region14: #{run.3} parent=1 // pred_check
      _
    $region15: #{run.3} parent=1 // pred_check_branch
      %125 = sbr.rel (0) target = $region17
    $region16: #{run.3} parent=1 // pred_region
      %s127 = ssub.s32 256, 256
      %128 = vsyncadd [#allocation3], %s127
      %s129 = sshll.u32 [#allocation2], 4
      %s130 = int_to_ptr.vmem [resolvable:$true] %s129
      %135 = dma.vmem_to_hbm [thread:$0]  %s130, 256, %s3, [#allocation3], 128, 128, 8
    $region17: #{run.3} parent=1 // pred_fallthru
      _
    // Predicated region
    $region18: #{run.3} parent=1 // pred_check
      _
    $region19: #{run.3} parent=1 // pred_check_branch
      %137 = sbr.rel (0) target = $region21
    $region20: #{run.3} parent=1 // pred_region
      %138 = dma.done [#allocation3], 256
    $region21: #{run.3} parent=1 // pred_fallthru
      _
    %139 = vsyncpa [#allocation3], 1

// kernel: run.2
$region0: #{run.2}
  #allocation0 [shape = 'u32[]', space=smem, size = 0x4, offset = 0x4, fixed_abs, tag = 'smem constant byte address 0x4 - core index']
  #allocation1 [shape = 'u32[144,128]{1,0:T(1,128)}', space=vmem, size = 0x12000, scoped, tag = 'internal scratch']
  #allocation2 [shape = 'f32[16,64]{1,0:T(8,128)}', space=vmem, size = 0x2000, scoped, tag = 'scratch operand']
  %s0 = inlined_call_operand.vmem [shape: f32[16,64], index: 0, kind: input, shape index: {}]
  %s1 = inlined_call_operand.vmem [shape: f32[2,1,64], index: 1, kind: input, shape index: {}]
  %s2 = inlined_call_operand.vmem [shape: bf16[2,64,128], index: 2, kind: input, shape index: {}]
  %s3 = inlined_call_operand.vmem [shape: bf16[2,64,64], index: 3, kind: input, shape index: {}]
  %s4 = inlined_call_operand.vmem [shape: f32[2,1,64], index: 4, kind: input, shape index: {}]
  %s5 = inlined_call_operand.vmem [shape: bf16[2,64,256], index: 5, kind: input, shape index: {}]
  %s6 = inlined_call_operand.vmem [shape: bf16[2,128,64], index: 6, kind: input, shape index: {}]
  %s7 = inlined_call_operand.vmem [shape: f32[16,16], index: 7, kind: input, shape index: {}]
  %s8 = inlined_call_operand.vmem [shape: f32[16,16], index: 8, kind: input, shape index: {}]
  %s9 = inlined_call_operand.vmem [shape: f32[16,16], index: 9, kind: input, shape index: {}]
  %s10 = inlined_call_operand.vmem [shape: f32[16,16], index: 10, kind: input, shape index: {}]
  %s11 = inlined_call_operand.vmem [shape: f32[16,16], index: 11, kind: input, shape index: {}]
  %s12 = inlined_call_operand.vmem [shape: f32[16,64], index: 12, kind: output, shape index: {}]
  %s13 = sld [smem:[#allocation0]]
  $region85: #{run.2} parent=0
    _
  %s15 = ssub.s32 1, %s13
  %s16 = scalar_select 0, %s15, %s13
  loop: start=0, step=1, limit=4
  $region2: #{run.2} parent=0 // loop_pre_header
    _
  $region3: #{run.2} parent=0 // loop_header
    %s18 = sphi 0, %s22
    %p19 = scmp.ge.s32.totalorder %s18, 4
    %s26 = sphi 0, %s26
    %s28 = sphi 0, %s26
    %s29 = sphi 0, %s28
    %s43 = sphi 0, %s29
    %s49 = sphi 0, %s51
    %s52 = sphi 0, %s49
    %s53 = sphi 0, %s52
    %s69 = sphi 0, %s53
    %s75 = sphi 0, %s77
    %s78 = sphi 0, %s75
    %s79 = sphi 0, %s78
    %s95 = sphi 0, %s79
    %s101 = sphi 0, %s103
    %s104 = sphi 0, %s101
    %s105 = sphi 0, %s104
    %s121 = sphi 0, %s105
    %s127 = sphi 0, %s129
    %s130 = sphi 0, %s127
    %s131 = sphi 0, %s130
    %s147 = sphi 0, %s131
    %s153 = sphi 0, %s155
    %s156 = sphi 0, %s153
    %s157 = sphi 0, %s156
    %s173 = sphi 0, %s157
    %s179 = sphi 0, %s181
    %s182 = sphi 0, %s179
    %s183 = sphi 0, %s182
    %s199 = sphi 0, %s183
    %s203 = sphi 0, %s203
    %s205 = sphi 0, %s203
    %s206 = sphi 0, %s205
    %s220 = sphi 0, %s206
    %s224 = sphi 0, %s224
    %s226 = sphi 0, %s224
    %s227 = sphi 0, %s226
    %s241 = sphi 0, %s227
    %s245 = sphi 0, %s245
    %s247 = sphi 0, %s245
    %s248 = sphi 0, %s247
    %s262 = sphi 0, %s248
    %s266 = sphi 0, %s266
    %s268 = sphi 0, %s266
    %s269 = sphi 0, %s268
    %s283 = sphi 0, %s269
    %s287 = sphi 0, %s287
    %s289 = sphi 0, %s287
    %s290 = sphi 0, %s289
    %s304 = sphi 0, %s290
    %s308 = sphi 0, %s308
    %s310 = sphi 0, %s308
    %s311 = sphi 0, %s310
    %s325 = sphi 0, %s311
  $region4: #{run.2} parent=0 // loop_header_branch
    %21 = sbr.rel (%p19) target = $region8
  $region5: #{run.2} parent=0 // loop_body
    %s23 = ssub.s32 %s18, 1
    %s24 = ssub.s32 %s18, 2
    %s25 = sadd.s32 %s18, 1
    %s27 = sadd.s32 %s26, 1
    %p30 = scmp.eq.s32.totalorder %s18, 1
    %p31 = scmp.ne.s32.totalorder %s26, %s28
    %p32 = scmp.eq.s32.totalorder %s18, 0
    %p33 = por %p31, %p32
    %p34 = scmp.ne.s32.totalorder %s26, %s28
    %p35 = scmp.eq.s32.totalorder %s23, 1
    %p36 = por %p34, %p35
    %p37 = scmp.ne.s32.totalorder %s28, %s29
    %p38 = scmp.eq.s32.totalorder %s23, 0
    %p39 = por %p37, %p38
    %p40 = scmp.ne.s32.totalorder %s28, %s29
    %p41 = scmp.eq.s32.totalorder %s24, 1
    %p42 = por %p40, %p41
    %p44 = scmp.ne.s32.totalorder %s29, %s43
    %p45 = scmp.eq.s32.totalorder %s24, 0
    %p46 = por %p44, %p45
    %s47 = ssub.s32 %s18, %s25
    %p48 = scmp.eq.s32.totalorder %s47, 0
    %s50 = sadd.s32 %s49, 1
    %s51 = scalar_select %p48, %s49, %s50
    %p54 = pneg %p48
    %p55 = scmp.eq.s32.totalorder %s18, 1
    %p56 = por %p54, %p55
    %p57 = scmp.ne.s32.totalorder %s49, %s52
    %p58 = scmp.eq.s32.totalorder %s18, 0
    %p59 = por %p57, %p58
    %p60 = scmp.ne.s32.totalorder %s49, %s52
    %p61 = scmp.eq.s32.totalorder %s23, 1
    %p62 = por %p60, %p61
    %p63 = scmp.ne.s32.totalorder %s52, %s53
    %p64 = scmp.eq.s32.totalorder %s23, 0
    %p65 = por %p63, %p64
    %p66 = scmp.ne.s32.totalorder %s52, %s53
    %p67 = scmp.eq.s32.totalorder %s24, 1
    %p68 = por %p66, %p67
    %p70 = scmp.ne.s32.totalorder %s53, %s69
    %p71 = scmp.eq.s32.totalorder %s24, 0
    %p72 = por %p70, %p71
    %s73 = ssub.s32 %s18, %s25
    %p74 = scmp.eq.s32.totalorder %s73, 0
    %s76 = sadd.s32 %s75, 1
    %s77 = scalar_select %p74, %s75, %s76
    %p80 = pneg %p74
    %p81 = scmp.eq.s32.totalorder %s18, 1
    %p82 = por %p80, %p81
    %p83 = scmp.ne.s32.totalorder %s75, %s78
    %p84 = scmp.eq.s32.totalorder %s18, 0
    %p85 = por %p83, %p84
    %p86 = scmp.ne.s32.totalorder %s75, %s78
    %p87 = scmp.eq.s32.totalorder %s23, 1
    %p88 = por %p86, %p87
    %p89 = scmp.ne.s32.totalorder %s78, %s79
    %p90 = scmp.eq.s32.totalorder %s23, 0
    %p91 = por %p89, %p90
    %p92 = scmp.ne.s32.totalorder %s78, %s79
    %p93 = scmp.eq.s32.totalorder %s24, 1
    %p94 = por %p92, %p93
    %p96 = scmp.ne.s32.totalorder %s79, %s95
    %p97 = scmp.eq.s32.totalorder %s24, 0
    %p98 = por %p96, %p97
    %s99 = ssub.s32 %s18, %s25
    %p100 = scmp.eq.s32.totalorder %s99, 0
    %s102 = sadd.s32 %s101, 1
    %s103 = scalar_select %p100, %s101, %s102
    %p106 = pneg %p100
    %p107 = scmp.eq.s32.totalorder %s18, 1
    %p108 = por %p106, %p107
    %p109 = scmp.ne.s32.totalorder %s101, %s104
    %p110 = scmp.eq.s32.totalorder %s18, 0
    %p111 = por %p109, %p110
    %p112 = scmp.ne.s32.totalorder %s101, %s104
    %p113 = scmp.eq.s32.totalorder %s23, 1
    %p114 = por %p112, %p113
    %p115 = scmp.ne.s32.totalorder %s104, %s105
    %p116 = scmp.eq.s32.totalorder %s23, 0
    %p117 = por %p115, %p116
    %p118 = scmp.ne.s32.totalorder %s104, %s105
    %p119 = scmp.eq.s32.totalorder %s24, 1
    %p120 = por %p118, %p119
    %p122 = scmp.ne.s32.totalorder %s105, %s121
    %p123 = scmp.eq.s32.totalorder %s24, 0
    %p124 = por %p122, %p123
    %s125 = ssub.s32 %s18, %s25
    %p126 = scmp.eq.s32.totalorder %s125, 0
    %s128 = sadd.s32 %s127, 1
    %s129 = scalar_select %p126, %s127, %s128
    %p132 = pneg %p126
    %p133 = scmp.eq.s32.totalorder %s18, 1
    %p134 = por %p132, %p133
    %p135 = scmp.ne.s32.totalorder %s127, %s130
    %p136 = scmp.eq.s32.totalorder %s18, 0
    %p137 = por %p135, %p136
    %p138 = scmp.ne.s32.totalorder %s127, %s130
    %p139 = scmp.eq.s32.totalorder %s23, 1
    %p140 = por %p138, %p139
    %p141 = scmp.ne.s32.totalorder %s130, %s131
    %p142 = scmp.eq.s32.totalorder %s23, 0
    %p143 = por %p141, %p142
    %p144 = scmp.ne.s32.totalorder %s130, %s131
    %p145 = scmp.eq.s32.totalorder %s24, 1
    %p146 = por %p144, %p145
    %p148 = scmp.ne.s32.totalorder %s131, %s147
    %p149 = scmp.eq.s32.totalorder %s24, 0
    %p150 = por %p148, %p149
    %s151 = ssub.s32 %s18, %s25
    %p152 = scmp.eq.s32.totalorder %s151, 0
    %s154 = sadd.s32 %s153, 1
    %s155 = scalar_select %p152, %s153, %s154
    %p158 = pneg %p152
    %p159 = scmp.eq.s32.totalorder %s18, 1
    %p160 = por %p158, %p159
    %p161 = scmp.ne.s32.totalorder %s153, %s156
    %p162 = scmp.eq.s32.totalorder %s18, 0
    %p163 = por %p161, %p162
    %p164 = scmp.ne.s32.totalorder %s153, %s156
    %p165 = scmp.eq.s32.totalorder %s23, 1
    %p166 = por %p164, %p165
    %p167 = scmp.ne.s32.totalorder %s156, %s157
    %p168 = scmp.eq.s32.totalorder %s23, 0
    %p169 = por %p167, %p168
    %p170 = scmp.ne.s32.totalorder %s156, %s157
    %p171 = scmp.eq.s32.totalorder %s24, 1
    %p172 = por %p170, %p171
    %p174 = scmp.ne.s32.totalorder %s157, %s173
    %p175 = scmp.eq.s32.totalorder %s24, 0
    %p176 = por %p174, %p175
    %s177 = ssub.s32 %s18, %s25
    %p178 = scmp.eq.s32.totalorder %s177, 0
    %s180 = sadd.s32 %s179, 1
    %s181 = scalar_select %p178, %s179, %s180
    %p184 = pneg %p178
    %p185 = scmp.eq.s32.totalorder %s18, 1
    %p186 = por %p184, %p185
    %p187 = scmp.ne.s32.totalorder %s179, %s182
    %p188 = scmp.eq.s32.totalorder %s18, 0
    %p189 = por %p187, %p188
    %p190 = scmp.ne.s32.totalorder %s179, %s182
    %p191 = scmp.eq.s32.totalorder %s23, 1
    %p192 = por %p190, %p191
    %p193 = scmp.ne.s32.totalorder %s182, %s183
    %p194 = scmp.eq.s32.totalorder %s23, 0
    %p195 = por %p193, %p194
    %p196 = scmp.ne.s32.totalorder %s182, %s183
    %p197 = scmp.eq.s32.totalorder %s24, 1
    %p198 = por %p196, %p197
    %p200 = scmp.ne.s32.totalorder %s183, %s199
    %p201 = scmp.eq.s32.totalorder %s24, 0
    %p202 = por %p200, %p201
    %s204 = sadd.s32 %s203, 1
    %p207 = scmp.eq.s32.totalorder %s18, 1
    %p208 = scmp.ne.s32.totalorder %s203, %s205
    %p209 = scmp.eq.s32.totalorder %s18, 0
    %p210 = por %p208, %p209
    %p211 = scmp.ne.s32.totalorder %s203, %s205
    %p212 = scmp.eq.s32.totalorder %s23, 1
    %p213 = por %p211, %p212
    %p214 = scmp.ne.s32.totalorder %s205, %s206
    %p215 = scmp.eq.s32.totalorder %s23, 0
    %p216 = por %p214, %p215
    %p217 = scmp.ne.s32.totalorder %s205, %s206
    %p218 = scmp.eq.s32.totalorder %s24, 1
    %p219 = por %p217, %p218
    %p221 = scmp.ne.s32.totalorder %s206, %s220
    %p222 = scmp.eq.s32.totalorder %s24, 0
    %p223 = por %p221, %p222
    %s225 = sadd.s32 %s224, 1
    %p228 = scmp.eq.s32.totalorder %s18, 1
    %p229 = scmp.ne.s32.totalorder %s224, %s226
    %p230 = scmp.eq.s32.totalorder %s18, 0
    %p231 = por %p229, %p230
    %p232 = scmp.ne.s32.totalorder %s224, %s226
    %p233 = scmp.eq.s32.totalorder %s23, 1
    %p234 = por %p232, %p233
    %p235 = scmp.ne.s32.totalorder %s226, %s227
    %p236 = scmp.eq.s32.totalorder %s23, 0
    %p237 = por %p235, %p236
    %p238 = scmp.ne.s32.totalorder %s226, %s227
    %p239 = scmp.eq.s32.totalorder %s24, 1
    %p240 = por %p238, %p239
    %p242 = scmp.ne.s32.totalorder %s227, %s241
    %p243 = scmp.eq.s32.totalorder %s24, 0
    %p244 = por %p242, %p243
    %s246 = sadd.s32 %s245, 1
    %p249 = scmp.eq.s32.totalorder %s18, 1
    %p250 = scmp.ne.s32.totalorder %s245, %s247
    %p251 = scmp.eq.s32.totalorder %s18, 0
    %p252 = por %p250, %p251
    %p253 = scmp.ne.s32.totalorder %s245, %s247
    %p254 = scmp.eq.s32.totalorder %s23, 1
    %p255 = por %p253, %p254
    %p256 = scmp.ne.s32.totalorder %s247, %s248
    %p257 = scmp.eq.s32.totalorder %s23, 0
    %p258 = por %p256, %p257
    %p259 = scmp.ne.s32.totalorder %s247, %s248
    %p260 = scmp.eq.s32.totalorder %s24, 1
    %p261 = por %p259, %p260
    %p263 = scmp.ne.s32.totalorder %s248, %s262
    %p264 = scmp.eq.s32.totalorder %s24, 0
    %p265 = por %p263, %p264
    %s267 = sadd.s32 %s266, 1
    %p270 = scmp.eq.s32.totalorder %s18, 1
    %p271 = scmp.ne.s32.totalorder %s266, %s268
    %p272 = scmp.eq.s32.totalorder %s18, 0
    %p273 = por %p271, %p272
    %p274 = scmp.ne.s32.totalorder %s266, %s268
    %p275 = scmp.eq.s32.totalorder %s23, 1
    %p276 = por %p274, %p275
    %p277 = scmp.ne.s32.totalorder %s268, %s269
    %p278 = scmp.eq.s32.totalorder %s23, 0
    %p279 = por %p277, %p278
    %p280 = scmp.ne.s32.totalorder %s268, %s269
    %p281 = scmp.eq.s32.totalorder %s24, 1
    %p282 = por %p280, %p281
    %p284 = scmp.ne.s32.totalorder %s269, %s283
    %p285 = scmp.eq.s32.totalorder %s24, 0
    %p286 = por %p284, %p285
    %s288 = sadd.s32 %s287, 1
    %p291 = scmp.eq.s32.totalorder %s18, 1
    %p292 = scmp.ne.s32.totalorder %s287, %s289
    %p293 = scmp.eq.s32.totalorder %s18, 0
    %p294 = por %p292, %p293
    %p295 = scmp.ne.s32.totalorder %s287, %s289
    %p296 = scmp.eq.s32.totalorder %s23, 1
    %p297 = por %p295, %p296
    %p298 = scmp.ne.s32.totalorder %s289, %s290
    %p299 = scmp.eq.s32.totalorder %s23, 0
    %p300 = por %p298, %p299
    %p301 = scmp.ne.s32.totalorder %s289, %s290
    %p302 = scmp.eq.s32.totalorder %s24, 1
    %p303 = por %p301, %p302
    %p305 = scmp.ne.s32.totalorder %s290, %s304
    %p306 = scmp.eq.s32.totalorder %s24, 0
    %p307 = por %p305, %p306
    %s309 = sadd.s32 %s308, 1
    %p312 = scmp.eq.s32.totalorder %s18, 1
    %p313 = scmp.ne.s32.totalorder %s308, %s310
    %p314 = scmp.eq.s32.totalorder %s18, 0
    %p315 = por %p313, %p314
    %p316 = scmp.ne.s32.totalorder %s308, %s310
    %p317 = scmp.eq.s32.totalorder %s23, 1
    %p318 = por %p316, %p317
    %p319 = scmp.ne.s32.totalorder %s310, %s311
    %p320 = scmp.eq.s32.totalorder %s23, 0
    %p321 = por %p319, %p320
    %p322 = scmp.ne.s32.totalorder %s310, %s311
    %p323 = scmp.eq.s32.totalorder %s24, 1
    %p324 = por %p322, %p323
    %p326 = scmp.ne.s32.totalorder %s311, %s325
    %p327 = scmp.eq.s32.totalorder %s24, 0
    %p328 = por %p326, %p327
    %p329 = scmp.le.s32.totalorder 1, %s18
    %p330 = scmp.lt.s32.totalorder %s18, 3
    %p331 = pnand %p329, %p330
    %p332 = pneg %p331
    // Predicated region
    $region9: #{run.2} parent=5 // pred_check
      _
    $region10: #{run.2} parent=5 // pred_check_branch
      %334 = sbr.rel (%p331) target = $region12
    $region11: #{run.2} parent=5 // pred_region
      %s335 = ssub.s32 %s18, 1
      // Predicated region
      $region13: #{run.2} parent=11 // pred_check
        %p336 = pneg %p39
      $region14: #{run.2} parent=11 // pred_check_branch
        %338 = sbr.rel (%p336) target = $region16
      $region15: #{run.2} parent=11 // pred_region
        _
      $region16: #{run.2} parent=11 // pred_fallthru
        _
      // Predicated region
      $region17: #{run.2} parent=11 // pred_check
        %p339 = pneg %p216
      $region18: #{run.2} parent=11 // pred_check_branch
        %341 = sbr.rel (%p339) target = $region20
      $region19: #{run.2} parent=11 // pred_region
        _
      $region20: #{run.2} parent=11 // pred_fallthru
        _
      // Predicated region
      $region21: #{run.2} parent=11 // pred_check
        %p342 = pneg %p237
      $region22: #{run.2} parent=11 // pred_check_branch
        %344 = sbr.rel (%p342) target = $region24
      $region23: #{run.2} parent=11 // pred_region
        _
      $region24: #{run.2} parent=11 // pred_fallthru
        _
      // Predicated region
      $region25: #{run.2} parent=11 // pred_check
        %p345 = pneg %p258
      $region26: #{run.2} parent=11 // pred_check_branch
        %347 = sbr.rel (%p345) target = $region28
      $region27: #{run.2} parent=11 // pred_region
        _
      $region28: #{run.2} parent=11 // pred_fallthru
        _
      // Predicated region
      $region29: #{run.2} parent=11 // pred_check
        %p348 = pneg %p279
      $region30: #{run.2} parent=11 // pred_check_branch
        %350 = sbr.rel (%p348) target = $region32
      $region31: #{run.2} parent=11 // pred_region
        _
      $region32: #{run.2} parent=11 // pred_fallthru
        _
      // Predicated region
      $region33: #{run.2} parent=11 // pred_check
        %p351 = pneg %p300
      $region34: #{run.2} parent=11 // pred_check_branch
        %353 = sbr.rel (%p351) target = $region36
      $region35: #{run.2} parent=11 // pred_region
        _
      $region36: #{run.2} parent=11 // pred_fallthru
        _
    $region12: #{run.2} parent=5 // pred_fallthru
      _
    %p354 = scmp.lt.s32.totalorder %s18, 2
    // Predicated region
    $region37: #{run.2} parent=5 // pred_check
      %p355 = pneg %p354
    $region38: #{run.2} parent=5 // pred_check_branch
      %357 = sbr.rel (%p355) target = $region40
    $region39: #{run.2} parent=5 // pred_region
      // Predicated region
      $region41: #{run.2} parent=39 // pred_check
        %p358 = pneg %p59
      $region42: #{run.2} parent=39 // pred_check_branch
        %360 = sbr.rel (%p358) target = $region44
      $region43: #{run.2} parent=39 // pred_region
        %p361 = scmp.lt.s32.totalorder %s18, 1
        %s362 = scalar_select %p361, %s18, 1
        %s363 = scalar_lea.vmem %s1, %s362
      $region44: #{run.2} parent=39 // pred_fallthru
        _
      // Predicated region
      $region45: #{run.2} parent=39 // pred_check
        %p364 = pneg %p85
      $region46: #{run.2} parent=39 // pred_check_branch
        %366 = sbr.rel (%p364) target = $region48
      $region47: #{run.2} parent=39 // pred_region
        %p367 = scmp.lt.s32.totalorder %s18, 1
        %s368 = scalar_select %p367, %s18, 1
        %s369 = smul.addr %s368, 8
        %s370 = smul.addr %s369, 4
        %s371 = scalar_lea.vmem %s2, %s370
      $region48: #{run.2} parent=39 // pred_fallthru
        _
      // Predicated region
      $region49: #{run.2} parent=39 // pred_check
        %p372 = pneg %p111
      $region50: #{run.2} parent=39 // pred_check_branch
        %374 = sbr.rel (%p372) target = $region52
      $region51: #{run.2} parent=39 // pred_region
        %p375 = scmp.lt.s32.totalorder %s18, 1
        %s376 = scalar_select %p375, %s18, 1
        %s377 = smul.addr %s376, 8
        %s378 = smul.addr %s377, 4
        %s379 = scalar_lea.vmem %s3, %s378
      $region52: #{run.2} parent=39 // pred_fallthru
        _
      // Predicated region
      $region53: #{run.2} parent=39 // pred_check
        %p380 = pneg %p137
      $region54: #{run.2} parent=39 // pred_check_branch
        %382 = sbr.rel (%p380) target = $region56
      $region55: #{run.2} parent=39 // pred_region
        %p383 = scmp.lt.s32.totalorder %s18, 1
        %s384 = scalar_select %p383, %s18, 1
        %s385 = scalar_lea.vmem %s4, %s384
      $region56: #{run.2} parent=39 // pred_fallthru
        _
      // Predicated region
      $region57: #{run.2} parent=39 // pred_check
        %p386 = pneg %p163
      $region58: #{run.2} parent=39 // pred_check_branch
        %388 = sbr.rel (%p386) target = $region60
      $region59: #{run.2} parent=39 // pred_region
        %p389 = scmp.lt.s32.totalorder %s18, 1
        %s390 = scalar_select %p389, %s18, 1
        %s391 = smul.addr %s390, 16
        %s392 = smul.addr %s391, 4
        %s393 = scalar_lea.vmem %s5, %s392
      $region60: #{run.2} parent=39 // pred_fallthru
        _
      // Predicated region
      $region61: #{run.2} parent=39 // pred_check
        %p394 = pneg %p189
      $region62: #{run.2} parent=39 // pred_check_branch
        %396 = sbr.rel (%p394) target = $region64
      $region63: #{run.2} parent=39 // pred_region
        %p397 = scmp.lt.s32.totalorder %s18, 1
        %s398 = scalar_select %p397, %s18, 1
        %s399 = smul.addr %s398, 16
        %s400 = smul.addr %s399, 4
        %s401 = scalar_lea.vmem %s6, %s400
      $region64: #{run.2} parent=39 // pred_fallthru
        _
    $region40: #{run.2} parent=5 // pred_fallthru
      _
    %p402 = scmp.le.s32.totalorder 1, %s18
    %p403 = scmp.lt.s32.totalorder %s18, 3
    %p404 = pnand %p402, %p403
    %p405 = pneg %p404
    // Predicated region
    $region65: #{run.2} parent=5 // pred_check
      _
    $region66: #{run.2} parent=5 // pred_check_branch
      %407 = sbr.rel (%p404) target = $region68
    $region67: #{run.2} parent=5 // pred_region
      %s408 = ssub.s32 %s18, 1
      %p409 = pneg %p39
      %p410 = pneg %p36
      %p411 = scmp.lt.s32.totalorder %s23, 1
      %s412 = scalar_select %p411, %s23, 1
      %s413 = scalar_lea.vmem %s1, %s412
      %p414 = pneg %p65
      %p415 = pneg %p62
      %p416 = scmp.lt.s32.totalorder %s23, 1
      %s417 = scalar_select %p416, %s23, 1
      %s418 = smul.addr %s417, 8
      %s419 = smul.addr %s418, 4
      %s420 = scalar_lea.vmem %s2, %s419
      %p421 = pneg %p91
      %p422 = pneg %p88
      %p423 = scmp.lt.s32.totalorder %s23, 1
      %s424 = scalar_select %p423, %s23, 1
      %s425 = smul.addr %s424, 8
      %s426 = smul.addr %s425, 4
      %s427 = scalar_lea.vmem %s3, %s426
      %p428 = pneg %p117
      %p429 = pneg %p114
      %p430 = scmp.lt.s32.totalorder %s23, 1
      %s431 = scalar_select %p430, %s23, 1
      %s432 = scalar_lea.vmem %s4, %s431
      %p433 = pneg %p143
      %p434 = pneg %p140
      %p435 = scmp.lt.s32.totalorder %s23, 1
      %s436 = scalar_select %p435, %s23, 1
      %s437 = smul.addr %s436, 16
      %s438 = smul.addr %s437, 4
      %s439 = scalar_lea.vmem %s5, %s438
      %p440 = pneg %p169
      %p441 = pneg %p166
      %p442 = scmp.lt.s32.totalorder %s23, 1
      %s443 = scalar_select %p442, %s23, 1
      %s444 = smul.addr %s443, 16
      %s445 = smul.addr %s444, 4
      %s446 = scalar_lea.vmem %s6, %s445
      %p447 = pneg %p195
      %p448 = pneg %p192
      %p449 = pneg %p216
      %p450 = pneg %p213
      %p451 = pneg %p237
      %p452 = pneg %p234
      %p453 = pneg %p258
      %p454 = pneg %p255
      %p455 = pneg %p279
      %p456 = pneg %p276
      %p457 = pneg %p300
      %p458 = pneg %p297
      %p459 = pneg %p321
      %p460 = pneg %p318
      %p461 = scmp.lt.s32.totalorder %s23, 1
      %s462 = scalar_select %p461, %s23, 1
      %s463 = scalar_lea.vmem %s1, %s462
      %p464 = scmp.lt.s32.totalorder %s23, 1
      %s465 = scalar_select %p464, %s23, 1
      %s466 = smul.addr %s465, 8
      %s467 = smul.addr %s466, 4
      %s468 = scalar_lea.vmem %s2, %s467
      %p469 = scmp.lt.s32.totalorder %s23, 1
      %s470 = scalar_select %p469, %s23, 1
      %s471 = smul.addr %s470, 8
      %s472 = smul.addr %s471, 4
      %s473 = scalar_lea.vmem %s3, %s472
      %p474 = scmp.lt.s32.totalorder %s23, 1
      %s475 = scalar_select %p474, %s23, 1
      %s476 = scalar_lea.vmem %s4, %s475
      %p477 = scmp.lt.s32.totalorder %s23, 1
      %s478 = scalar_select %p477, %s23, 1
      %s479 = smul.addr %s478, 16
      %s480 = smul.addr %s479, 4
      %s481 = scalar_lea.vmem %s5, %s480
      %p482 = scmp.lt.s32.totalorder %s23, 1
      %s483 = scalar_select %p482, %s23, 1
      %s484 = smul.addr %s483, 16
      %s485 = smul.addr %s484, 4
      %s486 = scalar_lea.vmem %s6, %s485
      %p488 = scmp.eq.s32.totalorder %s23, 0
      // Predicated region
      $region69: #{run.2} parent=67 // pred_check
        %p489 = pneg %p488
      $region70: #{run.2} parent=67 // pred_check_branch
        %491 = sbr.rel (%p489) target = $region72
      $region71: #{run.2} parent=67 // pred_region
        %v492 = vld [vmem:[%s0] sm:$0xff]
        %v493 = vld [vmem:[%s0 + $0x8] sm:$0xff]
        %vm494 = vcmask 523264
        %495 = vst.msk [vmem:[#allocation2] sm:$0xff] %vm494, %v492
        %496 = vst.msk [vmem:[#allocation2 + $0x8] sm:$0xff] %vm494, %v493
      $region72: #{run.2} parent=67 // pred_fallthru
        _
      %v497 = vld [vmem:[#allocation2] sm:$0xff]
      %v498 = vld [vmem:[#allocation2 + $0x8] sm:$0xff]
      %v499 = vmul.f32 %v497, %v497
      %v500 = vmul.f32 %v498, %v498
      %vm501 = vcmask 523264
      %v502 = vsel %vm501, %v499, 0.0
      %503 = vadd.xlane.f32.xlu0 %v502
      %v504 = vpop.xlane.xlu0 %503
      %v505 = vsel %vm501, %v500, 0.0
      %506 = vadd.xlane.f32.xlu0 %v505
      %v507 = vpop.xlane.xlu0 %506
      %v508 = vrcp.pop 64.0
      %v509 = vmul.f32 %v504, %v508
      %v510 = vmul.f32 %v507, %v508
      %v511 = vadd.f32 %v509, 1e-06
      %v512 = vadd.f32 %v510, 1e-06
      %v513 = vrsqrt.pop %v511
      %v514 = vrsqrt.pop %v512
      %v515 = vmul.f32 %v497, %v513
      %v516 = vmul.f32 %v498, %v514
      %v517 = vld [vmem:[%s463] sm:$0x1]
      %v519 = vlaneseq
      %v520 = vshrl.u32 %v519, 7
      %v521 = vsub.s32 0, %v520
      %v522 = vrot.slane %v517, %v521
      %v524 = vmul.f32 %v515, %v522
      %v525 = vmul.f32 %v516, %v522
      %v526 = vpack.c.bf16 %v525, %v524
      %v527 = vld [vmem:[%s468] sm:$0xf]
      %v528 = vld [vmem:[%s468 + $0x4] sm:$0xf]
      %v529 = vld [vmem:[%s468 + $0x8] sm:$0xf]
      %v530 = vld [vmem:[%s468 + $0xc] sm:$0xf]
      %v531 = vld [vmem:[%s468 + $0x10] sm:$0xf]
      %v532 = vld [vmem:[%s468 + $0x14] sm:$0xf]
      %v533 = vld [vmem:[%s468 + $0x18] sm:$0xf]
      %v534 = vld [vmem:[%s468 + $0x1c] sm:$0xf]
      %v543 = vunpack.c.l.b16 %v527
      %v544 = vunpack.c.l.b16 %v528
      %v545 = vunpack.c.l.b16 %v529
      %v546 = vunpack.c.l.b16 %v530
      %v547 = vunpack.c.l.b16 %v531
      %v548 = vunpack.c.l.b16 %v532
      %v549 = vunpack.c.l.b16 %v533
      %v550 = vunpack.c.l.b16 %v534
      %v551 = vpack.c.b16 %v544, %v543
      %v552 = vpack.c.b16 %v546, %v545
      %v553 = vpack.c.b16 %v548, %v547
      %v554 = vpack.c.b16 %v550, %v549
      %v560 = vsel %vm501, %v526, 0
      %562 = vmatprep.subr.bf16.mxu0 0
      %563 = vmatpush1.bf16.msra.mxu0 0
      %564 = vmatprep.subr.bf16.mxu0 0
      %565 = vmatpush1.bf16.msra.mxu0 0
      %566 = vmatprep.subr.bf16.mxu0 0
      %567 = vmatpush1.bf16.msra.mxu0 0
      %568 = vmatprep.subr.bf16.mxu0 0
      %569 = vmatpush1.bf16.msra.mxu0 0
      %570 = vmatprep.subr.bf16.mxu0 0
      %571 = vmatpush1.bf16.msra.mxu0 %v554
      %572 = vmatprep.subr.bf16.mxu0 0
      %573 = vmatpush1.bf16.msra.mxu0 %v553
      %574 = vmatprep.subr.bf16.mxu0 0
      %575 = vmatpush1.bf16.msra.mxu0 %v552
      %576 = vmatprep.subr.bf16.mxu0 0
      %577 = vmatpush1.bf16.msra.mxu0 %v551
      %578 = vmatprep.subr.bf16.mxu0 0
      %579 = vmatpush2.bf16.msra.mxu0 0
      %580 = vmatprep.subr.bf16.mxu0 0
      %581 = vmatpush2.bf16.msra.mxu0 0
      %582 = vmatprep.subr.bf16.mxu0 0
      %583 = vmatpush2.bf16.msra.mxu0 0
      %584 = vmatprep.subr.bf16.mxu0 0
      %585 = vmatpush2.bf16.msra.mxu0 0
      %586 = vmatprep.subr.bf16.mxu0 0
      %587 = vmatpush2.bf16.msra.mxu0 0
      %588 = vmatprep.subr.bf16.mxu0 0
      %589 = vmatpush2.bf16.msra.mxu0 0
      %590 = vmatprep.subr.bf16.mxu0 0
      %591 = vmatpush2.bf16.msra.mxu0 0
      %592 = vmatprep.subr.bf16.mxu0 0
      %593 = vmatpush2.bf16.msra.mxu0 0
      %594 = vmatprep.mubr.bf16.mxu0 0
      %595 = vmatmul.mubr.bf16.gmra.mxu0 %v560
      %v596 = vpop.f32.mrf.mxu0
      %v597 = vadd.f32 0.0, %v596
      %v598 = vpop.f32.mrf.mxu0
      %v599 = vpop.f32.mrf.mxu0
      %v600 = vadd.f32 0.0, %v599
      %v601 = vpop.f32.mrf.mxu0
      %602 = vdwg.mxu0
      %v603 = vld [vmem:[%s7] sm:$0xff]
      %v604 = vld [vmem:[%s7 + $0x8] sm:$0xff]
      %v605 = vld [vmem:[%s8] sm:$0xff]
      %v606 = vld [vmem:[%s8 + $0x8] sm:$0xff]
      %v607 = vld [vmem:[%s9] sm:$0xff]
      %v608 = vld [vmem:[%s9 + $0x8] sm:$0xff]
      %v609 = vld [vmem:[%s10] sm:$0xff]
      %v610 = vld [vmem:[%s10 + $0x8] sm:$0xff]
      %v611 = vld [vmem:[%s11] sm:$0xff]
      %v612 = vld [vmem:[%s11 + $0x8] sm:$0xff]
      %615 = vrot.lane.b32.xlu0 %v607, 64
      %v616 = vpop.permute.xlu0 %615
      %617 = vrot.lane.b32.xlu0 %v608, 64
      %v618 = vpop.permute.xlu0 %617
      %v621 = vmul.f32 %v597, %v616
      %v622 = vmul.f32 %v600, %v618
      %625 = vrot.lane.b32.xlu0 %v597, 56
      %v626 = vpop.permute.xlu0 %625
      %627 = vrot.lane.b32.xlu0 %v600, 56
      %v628 = vpop.permute.xlu0 %627
      %631 = vrot.lane.b32.xlu0 %v597, 72
      %v632 = vpop.permute.xlu0 %631
      %633 = vrot.lane.b32.xlu0 %v600, 72
      %v634 = vpop.permute.xlu0 %633
      %vm637 = vcmask 64512
      %v638 = vsel %vm637, %v626, %v632
      %v639 = vsel %vm637, %v628, %v634
      %v640 = vmul.f32 %v638, %v609
      %v641 = vmul.f32 %v639, %v610
      %644 = vrot.lane.b32.xlu0 %v640, 64
      %v645 = vpop.permute.xlu0 %644
      %646 = vrot.lane.b32.xlu0 %v641, 64
      %v647 = vpop.permute.xlu0 %646
      %v650 = vadd.f32 %v621, %v645
      %v651 = vadd.f32 %v622, %v647
      %652 = vrot.lane.b32.xlu0 %v607, 80
      %v653 = vpop.permute.xlu0 %652
      %654 = vrot.lane.b32.xlu0 %v608, 80
      %v655 = vpop.permute.xlu0 %654
      %v658 = vmul.f32 %v597, %v653
      %v659 = vmul.f32 %v600, %v655
      %660 = vrot.lane.b32.xlu0 %v597, 40
      %v661 = vpop.permute.xlu0 %660
      %662 = vrot.lane.b32.xlu0 %v600, 40
      %v663 = vpop.permute.xlu0 %662
      %v666 = vsel %vm637, %v661, %v626
      %v667 = vsel %vm637, %v663, %v628
      %v668 = vmul.f32 %v666, %v609
      %v669 = vmul.f32 %v667, %v610
      %672 = vrot.lane.b32.xlu0 %v668, 80
      %v673 = vpop.permute.xlu0 %672
      %674 = vrot.lane.b32.xlu0 %v669, 80
      %v675 = vpop.permute.xlu0 %674
      %v678 = vadd.f32 %v658, %v673
      %v679 = vadd.f32 %v659, %v675
      %v680 = vmul.f32 %v597, %v603
      %v681 = vmul.f32 %v600, %v604
      %682 = vrot.lane.b32.xlu0 %v597, 120
      %v683 = vpop.permute.xlu0 %682
      %684 = vrot.lane.b32.xlu0 %v600, 120
      %v685 = vpop.permute.xlu0 %684
      %688 = vrot.lane.b32.xlu0 %v597, 8
      %v689 = vpop.permute.xlu0 %688
      %690 = vrot.lane.b32.xlu0 %v600, 8
      %v691 = vpop.permute.xlu0 %690
      %v694 = vsel %vm637, %v683, %v689
      %v695 = vsel %vm637, %v685, %v691
      %v696 = vmul.f32 %v694, %v605
      %v697 = vmul.f32 %v695, %v606
      %v698 = vadd.f32 %v680, %v696
      %v699 = vadd.f32 %v681, %v697
      %702 = vrot.lane.b32.xlu0 %v650, 64
      %v703 = vpop.permute.xlu0 %702
      %704 = vrot.lane.b32.xlu0 %v651, 64
      %v705 = vpop.permute.xlu0 %704
      %vm706 = vcmask 130048
      %v708 = vsel %vm706, %v698, 0
      %v711 = vsel %vm706, %v699, 0
      %v713 = vsel %vm706, %v703, 0
      %v715 = vsel %vm706, %v705, 0
      %717 = vmatprep.subr.mxu0 0.0
      %718 = vmatpush1.xpose.msra.mxu0 0.0
      %719 = vmatprep.subr.mxu0 0.0
      %720 = vmatpush1.xpose.msra.mxu0 0.0
      %721 = vmatprep.subr.mxu0 0.0
      %722 = vmatpush1.xpose.msra.mxu0 0.0
      %723 = vmatprep.subr.mxu0 0.0
      %724 = vmatpush1.xpose.msra.mxu0 0.0
      %725 = vmatprep.subr.mxu0 0.0
      %726 = vmatpush1.xpose.msra.mxu0 0.0
      %727 = vmatprep.subr.mxu0 0.0
      %728 = vmatpush1.xpose.msra.mxu0 0.0
      %729 = vmatprep.subr.mxu0 0.0
      %730 = vmatpush1.xpose.msra.mxu0 0.0
      %731 = vmatprep.subr.mxu0 0.0
      %732 = vmatpush1.xpose.msra.mxu0 0.0
      %733 = vmatprep.subr.mxu0 0.0
      %734 = vmatpush1.xpose.msra.mxu0 0.0
      %735 = vmatprep.subr.mxu0 0.0
      %736 = vmatpush1.xpose.msra.mxu0 0.0
      %737 = vmatprep.subr.mxu0 0.0
      %738 = vmatpush1.xpose.msra.mxu0 0.0
      %739 = vmatprep.subr.mxu0 0.0
      %740 = vmatpush1.xpose.msra.mxu0 0.0
      %741 = vmatprep.subr.mxu0 0.0
      %742 = vmatpush1.xpose.msra.mxu0 0.0
      %743 = vmatprep.subr.mxu0 0.0
      %744 = vmatpush1.xpose.msra.mxu0 0.0
      %745 = vmatprep.subr.mxu0 0.0
      %746 = vmatpush1.xpose.msra.mxu0 %v715
      %747 = vmatprep.subr.mxu0 0.0
      %748 = vmatpush1.xpose.msra.mxu0 %v713
      %749 = vmatprep.subr.mxu0 0.0
      %750 = vmatpush2.xpose.msra.mxu0 0.0
      %751 = vmatprep.subr.mxu0 0.0
      %752 = vmatpush2.xpose.msra.mxu0 0.0
      %753 = vmatprep.subr.mxu0 0.0
      %754 = vmatpush2.xpose.msra.mxu0 0.0
      %755 = vmatprep.subr.mxu0 0.0
      %756 = vmatpush2.xpose.msra.mxu0 0.0
      %757 = vmatprep.subr.mxu0 0.0
      %758 = vmatpush2.xpose.msra.mxu0 0.0
      %759 = vmatprep.subr.mxu0 0.0
      %760 = vmatpush2.xpose.msra.mxu0 0.0
      %761 = vmatprep.subr.mxu0 0.0
      %762 = vmatpush2.xpose.msra.mxu0 0.0
      %763 = vmatprep.subr.mxu0 0.0
      %764 = vmatpush2.xpose.msra.mxu0 0.0
      %765 = vmatprep.subr.mxu0 0.0
      %766 = vmatpush2.xpose.msra.mxu0 0.0
      %767 = vmatprep.subr.mxu0 0.0
      %768 = vmatpush2.xpose.msra.mxu0 0.0
      %769 = vmatprep.subr.mxu0 0.0
      %770 = vmatpush2.xpose.msra.mxu0 0.0
      %771 = vmatprep.subr.mxu0 0.0
      %772 = vmatpush2.xpose.msra.mxu0 0.0
      %773 = vmatprep.subr.mxu0 0.0
      %774 = vmatpush2.xpose.msra.mxu0 0.0
      %775 = vmatprep.subr.mxu0 0.0
      %776 = vmatpush2.xpose.msra.mxu0 0.0
      %777 = vmatprep.subr.mxu0 0.0
      %778 = vmatpush2.xpose.msra.mxu0 0.0
      %779 = vmatprep.subr.mxu0 0.0
      %780 = vmatpush2.xpose.msra.mxu0 0.0
      %781 = vmatprep.mubr.f32.mxu0 0.0
      %782 = vmatmul.mubr.f32.gmra.mxu0 %v708
      %v783 = vpop.f32.mrf.mxu0
      %v784 = vadd.f32 %v611, %v783
      %v785 = vpop.f32.mrf.mxu0
      %786 = vmatprep.mubr.f32.mxu0 0.0
      %787 = vmatmul.mubr.f32.gmra.mxu0 %v711
      %v788 = vpop.f32.mrf.mxu0
      %v789 = vadd.f32 %v612, %v788
      %v790 = vpop.f32.mrf.mxu0
      %791 = vdwg.mxu0
      %v792 = vsel %vm706, %v784, -inf
      %793 = vmax.xlane.f32.xlu0 %v792
      %v794 = vpop.xlane.xlu0 %793
      %v795 = vsel %vm706, %v789, -inf
      %796 = vmax.xlane.f32.xlu0 %v795
      %v797 = vpop.xlane.xlu0 %796
      %v798 = vsub.f32 %v784, %v794
      %v799 = vsub.f32 %v789, %v797
      %v800 = vmul.f32 %v798, 1.442695
      %v801 = vpow.pop %v800
      %v802 = vmul.f32 %v799, 1.442695
      %v803 = vpow.pop %v802
      %v804 = vsel %vm706, %v801, 0.0
      %805 = vadd.xlane.f32.xlu0 %v804
      %v806 = vpop.xlane.xlu0 %805
      %v807 = vsel %vm706, %v803, 0.0
      %808 = vadd.xlane.f32.xlu0 %v807
      %v809 = vpop.xlane.xlu0 %808
      %v810 = vrcp.pop %v806
      %v811 = vrcp.pop %v809
      %v812 = vmul.f32 %v801, %v810
      %v813 = vmul.f32 %v803, %v811
      %814 = vrot.lane.b32.xlu0 %v597, 32
      %v815 = vpop.permute.xlu0 %814
      %816 = vrot.lane.b32.xlu0 %v600, 32
      %v817 = vpop.permute.xlu0 %816
      %v821 = vsel %vm706, %v812, 0
      %v824 = vsel %vm706, %v813, 0
      %826 = vmatprep.subr.mxu0 0.0
      %827 = vmatpush1.msra.mxu0 0.0
      %828 = vmatprep.subr.mxu0 0.0
      %829 = vmatpush1.msra.mxu0 0.0
      %830 = vmatprep.subr.mxu0 0.0
      %831 = vmatpush1.msra.mxu0 0.0
      %832 = vmatprep.subr.mxu0 0.0
      %833 = vmatpush1.msra.mxu0 0.0
      %834 = vmatprep.subr.mxu0 0.0
      %835 = vmatpush1.msra.mxu0 0.0
      %836 = vmatprep.subr.mxu0 0.0
      %837 = vmatpush1.msra.mxu0 0.0
      %838 = vmatprep.subr.mxu0 0.0
      %839 = vmatpush1.msra.mxu0 0.0
      %840 = vmatprep.subr.mxu0 0.0
      %841 = vmatpush1.msra.mxu0 0.0
      %842 = vmatprep.subr.mxu0 0.0
      %843 = vmatpush1.msra.mxu0 0.0
      %844 = vmatprep.subr.mxu0 0.0
      %845 = vmatpush1.msra.mxu0 0.0
      %846 = vmatprep.subr.mxu0 0.0
      %847 = vmatpush1.msra.mxu0 0.0
      %848 = vmatprep.subr.mxu0 0.0
      %849 = vmatpush1.msra.mxu0 0.0
      %850 = vmatprep.subr.mxu0 0.0
      %851 = vmatpush1.msra.mxu0 0.0
      %852 = vmatprep.subr.mxu0 0.0
      %853 = vmatpush1.msra.mxu0 0.0
      %854 = vmatprep.subr.mxu0 0.0
      %855 = vmatpush1.msra.mxu0 %v817
      %856 = vmatprep.subr.mxu0 0.0
      %857 = vmatpush1.msra.mxu0 %v815
      %858 = vmatprep.subr.mxu0 0.0
      %859 = vmatpush2.msra.mxu0 0.0
      %860 = vmatprep.subr.mxu0 0.0
      %861 = vmatpush2.msra.mxu0 0.0
      %862 = vmatprep.subr.mxu0 0.0
      %863 = vmatpush2.msra.mxu0 0.0
      %864 = vmatprep.subr.mxu0 0.0
      %865 = vmatpush2.msra.mxu0 0.0
      %866 = vmatprep.subr.mxu0 0.0
      %867 = vmatpush2.msra.mxu0 0.0
      %868 = vmatprep.subr.mxu0 0.0
      %869 = vmatpush2.msra.mxu0 0.0
      %870 = vmatprep.subr.mxu0 0.0
      %871 = vmatpush2.msra.mxu0 0.0
      %872 = vmatprep.subr.mxu0 0.0
      %873 = vmatpush2.msra.mxu0 0.0
      %874 = vmatprep.subr.mxu0 0.0
      %875 = vmatpush2.msra.mxu0 0.0
      %876 = vmatprep.subr.mxu0 0.0
      %877 = vmatpush2.msra.mxu0 0.0
      %878 = vmatprep.subr.mxu0 0.0
      %879 = vmatpush2.msra.mxu0 0.0
      %880 = vmatprep.subr.mxu0 0.0
      %881 = vmatpush2.msra.mxu0 0.0
      %882 = vmatprep.subr.mxu0 0.0
      %883 = vmatpush2.msra.mxu0 0.0
      %884 = vmatprep.subr.mxu0 0.0
      %885 = vmatpush2.msra.mxu0 0.0
      %886 = vmatprep.subr.mxu0 0.0
      %887 = vmatpush2.msra.mxu0 0.0
      %888 = vmatprep.subr.mxu0 0.0
      %889 = vmatpush2.msra.mxu0 0.0
      %890 = vmatprep.mubr.f32.mxu0 0.0
      %891 = vmatmul.mubr.f32.gmra.mxu0 %v821
      %v892 = vpop.f32.mrf.mxu0
      %v893 = vadd.f32 0.0, %v892
      %v894 = vpop.f32.mrf.mxu0
      %895 = vmatprep.mubr.f32.mxu0 0.0
      %896 = vmatmul.mubr.f32.gmra.mxu0 %v824
      %v897 = vpop.f32.mrf.mxu0
      %v898 = vadd.f32 0.0, %v897
      %v899 = vpop.f32.mrf.mxu0
      %900 = vdwg.mxu0
      %903 = vrot.lane.b32.xlu0 %v603, 16
      %v904 = vpop.permute.xlu0 %903
      %905 = vrot.lane.b32.xlu0 %v604, 16
      %v906 = vpop.permute.xlu0 %905
      %v909 = vmul.f32 %v597, %v904
      %v910 = vmul.f32 %v600, %v906
      %911 = vrot.lane.b32.xlu0 %v597, 104
      %v912 = vpop.permute.xlu0 %911
      %913 = vrot.lane.b32.xlu0 %v600, 104
      %v914 = vpop.permute.xlu0 %913
      %v917 = vsel %vm637, %v912, %v683
      %v918 = vsel %vm637, %v914, %v685
      %v919 = vmul.f32 %v917, %v605
      %v920 = vmul.f32 %v918, %v606
      %923 = vrot.lane.b32.xlu0 %v919, 16
      %v924 = vpop.permute.xlu0 %923
      %925 = vrot.lane.b32.xlu0 %v920, 16
      %v926 = vpop.permute.xlu0 %925
      %v929 = vadd.f32 %v909, %v924
      %v930 = vadd.f32 %v910, %v926
      %933 = vrot.lane.b32.xlu0 %v929, 112
      %v934 = vpop.permute.xlu0 %933
      %935 = vrot.lane.b32.xlu0 %v930, 112
      %v936 = vpop.permute.xlu0 %935
      %v937 = vsel %vm706, %v934, 0
      %v939 = vsel %vm706, %v936, 0
      %941 = vmatprep.subr.mxu0 0.0
      %942 = vmatpush1.xpose.msra.mxu0 0.0
      %943 = vmatprep.subr.mxu0 0.0
      %944 = vmatpush1.xpose.msra.mxu0 0.0
      %945 = vmatprep.subr.mxu0 0.0
      %946 = vmatpush1.xpose.msra.mxu0 0.0
      %947 = vmatprep.subr.mxu0 0.0
      %948 = vmatpush1.xpose.msra.mxu0 0.0
      %949 = vmatprep.subr.mxu0 0.0
      %950 = vmatpush1.xpose.msra.mxu0 0.0
      %951 = vmatprep.subr.mxu0 0.0
      %952 = vmatpush1.xpose.msra.mxu0 0.0
      %953 = vmatprep.subr.mxu0 0.0
      %954 = vmatpush1.xpose.msra.mxu0 0.0
      %955 = vmatprep.subr.mxu0 0.0
      %956 = vmatpush1.xpose.msra.mxu0 0.0
      %957 = vmatprep.subr.mxu0 0.0
      %958 = vmatpush1.xpose.msra.mxu0 0.0
      %959 = vmatprep.subr.mxu0 0.0
      %960 = vmatpush1.xpose.msra.mxu0 0.0
      %961 = vmatprep.subr.mxu0 0.0
      %962 = vmatpush1.xpose.msra.mxu0 0.0
      %963 = vmatprep.subr.mxu0 0.0
      %964 = vmatpush1.xpose.msra.mxu0 0.0
      %965 = vmatprep.subr.mxu0 0.0
      %966 = vmatpush1.xpose.msra.mxu0 0.0
      %967 = vmatprep.subr.mxu0 0.0
      %968 = vmatpush1.xpose.msra.mxu0 0.0
      %969 = vmatprep.subr.mxu0 0.0
      %970 = vmatpush1.xpose.msra.mxu0 %v715
      %971 = vmatprep.subr.mxu0 0.0
      %972 = vmatpush1.xpose.msra.mxu0 %v713
      %973 = vmatprep.subr.mxu0 0.0
      %974 = vmatpush2.xpose.msra.mxu0 0.0
      %975 = vmatprep.subr.mxu0 0.0
      %976 = vmatpush2.xpose.msra.mxu0 0.0
      %977 = vmatprep.subr.mxu0 0.0
      %978 = vmatpush2.xpose.msra.mxu0 0.0
      %979 = vmatprep.subr.mxu0 0.0
      %980 = vmatpush2.xpose.msra.mxu0 0.0
      %981 = vmatprep.subr.mxu0 0.0
      %982 = vmatpush2.xpose.msra.mxu0 0.0
      %983 = vmatprep.subr.mxu0 0.0
      %984 = vmatpush2.xpose.msra.mxu0 0.0
      %985 = vmatprep.subr.mxu0 0.0
      %986 = vmatpush2.xpose.msra.mxu0 0.0
      %987 = vmatprep.subr.mxu0 0.0
      %988 = vmatpush2.xpose.msra.mxu0 0.0
      %989 = vmatprep.subr.mxu0 0.0
      %990 = vmatpush2.xpose.msra.mxu0 0.0
      %991 = vmatprep.subr.mxu0 0.0
      %992 = vmatpush2.xpose.msra.mxu0 0.0
      %993 = vmatprep.subr.mxu0 0.0
      %994 = vmatpush2.xpose.msra.mxu0 0.0
      %995 = vmatprep.subr.mxu0 0.0
      %996 = vmatpush2.xpose.msra.mxu0 0.0
      %997 = vmatprep.subr.mxu0 0.0
      %998 = vmatpush2.xpose.msra.mxu0 0.0
      %999 = vmatprep.subr.mxu0 0.0
      %1000 = vmatpush2.xpose.msra.mxu0 0.0
      %1001 = vmatprep.subr.mxu0 0.0
      %1002 = vmatpush2.xpose.msra.mxu0 0.0
      %1003 = vmatprep.subr.mxu0 0.0
      %1004 = vmatpush2.xpose.msra.mxu0 0.0
      %1005 = vmatprep.mubr.f32.mxu0 0.0
      %1006 = vmatmul.mubr.f32.gmra.mxu0 %v937
      %v1007 = vpop.f32.mrf.mxu0
      %v1008 = vadd.f32 %v611, %v1007
      %v1009 = vpop.f32.mrf.mxu0
      %1010 = vmatprep.mubr.f32.mxu0 0.0
      %1011 = vmatmul.mubr.f32.gmra.mxu0 %v939
      %v1012 = vpop.f32.mrf.mxu0
      %v1013 = vadd.f32 %v612, %v1012
      %v1014 = vpop.f32.mrf.mxu0
      %1015 = vdwg.mxu0
      %v1016 = vsel %vm706, %v1008, -inf
      %1017 = vmax.xlane.f32.xlu0 %v1016
      %v1018 = vpop.xlane.xlu0 %1017
      %v1019 = vsel %vm706, %v1013, -inf
      %1020 = vmax.xlane.f32.xlu0 %v1019
      %v1021 = vpop.xlane.xlu0 %1020
      %v1022 = vsub.f32 %v1008, %v1018
      %v1023 = vsub.f32 %v1013, %v1021
      %v1024 = vmul.f32 %v1022, 1.442695
      %v1025 = vpow.pop %v1024
      %v1026 = vmul.f32 %v1023, 1.442695
      %v1027 = vpow.pop %v1026
      %v1028 = vsel %vm706, %v1025, 0.0
      %1029 = vadd.xlane.f32.xlu0 %v1028
      %v1030 = vpop.xlane.xlu0 %1029
      %v1031 = vsel %vm706, %v1027, 0.0
      %1032 = vadd.xlane.f32.xlu0 %v1031
      %v1033 = vpop.xlane.xlu0 %1032
      %v1034 = vrcp.pop %v1030
      %v1035 = vrcp.pop %v1033
      %v1036 = vmul.f32 %v1025, %v1034
      %v1037 = vmul.f32 %v1027, %v1035
      %v1039 = vsel %vm706, %v1036, 0
      %v1042 = vsel %vm706, %v1037, 0
      %1044 = vmatprep.subr.mxu0 0.0
      %1045 = vmatpush1.msra.mxu0 0.0
      %1046 = vmatprep.subr.mxu0 0.0
      %1047 = vmatpush1.msra.mxu0 0.0
      %1048 = vmatprep.subr.mxu0 0.0
      %1049 = vmatpush1.msra.mxu0 0.0
      %1050 = vmatprep.subr.mxu0 0.0
      %1051 = vmatpush1.msra.mxu0 0.0
      %1052 = vmatprep.subr.mxu0 0.0
      %1053 = vmatpush1.msra.mxu0 0.0
      %1054 = vmatprep.subr.mxu0 0.0
      %1055 = vmatpush1.msra.mxu0 0.0
      %1056 = vmatprep.subr.mxu0 0.0
      %1057 = vmatpush1.msra.mxu0 0.0
      %1058 = vmatprep.subr.mxu0 0.0
      %1059 = vmatpush1.msra.mxu0 0.0
      %1060 = vmatprep.subr.mxu0 0.0
      %1061 = vmatpush1.msra.mxu0 0.0
      %1062 = vmatprep.subr.mxu0 0.0
      %1063 = vmatpush1.msra.mxu0 0.0
      %1064 = vmatprep.subr.mxu0 0.0
      %1065 = vmatpush1.msra.mxu0 0.0
      %1066 = vmatprep.subr.mxu0 0.0
      %1067 = vmatpush1.msra.mxu0 0.0
      %1068 = vmatprep.subr.mxu0 0.0
      %1069 = vmatpush1.msra.mxu0 0.0
      %1070 = vmatprep.subr.mxu0 0.0
      %1071 = vmatpush1.msra.mxu0 0.0
      %1072 = vmatprep.subr.mxu0 0.0
      %1073 = vmatpush1.msra.mxu0 %v817
      %1074 = vmatprep.subr.mxu0 0.0
      %1075 = vmatpush1.msra.mxu0 %v815
      %1076 = vmatprep.subr.mxu0 0.0
      %1077 = vmatpush2.msra.mxu0 0.0
      %1078 = vmatprep.subr.mxu0 0.0
      %1079 = vmatpush2.msra.mxu0 0.0
      %1080 = vmatprep.subr.mxu0 0.0
      %1081 = vmatpush2.msra.mxu0 0.0
      %1082 = vmatprep.subr.mxu0 0.0
      %1083 = vmatpush2.msra.mxu0 0.0
      %1084 = vmatprep.subr.mxu0 0.0
      %1085 = vmatpush2.msra.mxu0 0.0
      %1086 = vmatprep.subr.mxu0 0.0
      %1087 = vmatpush2.msra.mxu0 0.0
      %1088 = vmatprep.subr.mxu0 0.0
      %1089 = vmatpush2.msra.mxu0 0.0
      %1090 = vmatprep.subr.mxu0 0.0
      %1091 = vmatpush2.msra.mxu0 0.0
      %1092 = vmatprep.subr.mxu0 0.0
      %1093 = vmatpush2.msra.mxu0 0.0
      %1094 = vmatprep.subr.mxu0 0.0
      %1095 = vmatpush2.msra.mxu0 0.0
      %1096 = vmatprep.subr.mxu0 0.0
      %1097 = vmatpush2.msra.mxu0 0.0
      %1098 = vmatprep.subr.mxu0 0.0
      %1099 = vmatpush2.msra.mxu0 0.0
      %1100 = vmatprep.subr.mxu0 0.0
      %1101 = vmatpush2.msra.mxu0 0.0
      %1102 = vmatprep.subr.mxu0 0.0
      %1103 = vmatpush2.msra.mxu0 0.0
      %1104 = vmatprep.subr.mxu0 0.0
      %1105 = vmatpush2.msra.mxu0 0.0
      %1106 = vmatprep.subr.mxu0 0.0
      %1107 = vmatpush2.msra.mxu0 0.0
      %1108 = vmatprep.mubr.f32.mxu0 0.0
      %1109 = vmatmul.mubr.f32.gmra.mxu0 %v1039
      %v1110 = vpop.f32.mrf.mxu0
      %v1111 = vadd.f32 0.0, %v1110
      %v1112 = vpop.f32.mrf.mxu0
      %1113 = vmatprep.mubr.f32.mxu0 0.0
      %1114 = vmatmul.mubr.f32.gmra.mxu0 %v1042
      %v1115 = vpop.f32.mrf.mxu0
      %v1116 = vadd.f32 0.0, %v1115
      %v1117 = vpop.f32.mrf.mxu0
      %1118 = vdwg.mxu0
      %1119 = vrot.lane.b32.xlu0 %v603, 32
      %v1120 = vpop.permute.xlu0 %1119
      %1121 = vrot.lane.b32.xlu0 %v604, 32
      %v1122 = vpop.permute.xlu0 %1121
      %v1125 = vmul.f32 %v597, %v1120
      %v1126 = vmul.f32 %v600, %v1122
      %1127 = vrot.lane.b32.xlu0 %v597, 88
      %v1128 = vpop.permute.xlu0 %1127
      %1129 = vrot.lane.b32.xlu0 %v600, 88
      %v1130 = vpop.permute.xlu0 %1129
      %v1133 = vsel %vm637, %v1128, %v912
      %v1134 = vsel %vm637, %v1130, %v914
      %v1135 = vmul.f32 %v1133, %v605
      %v1136 = vmul.f32 %v1134, %v606
      %1139 = vrot.lane.b32.xlu0 %v1135, 32
      %v1140 = vpop.permute.xlu0 %1139
      %1141 = vrot.lane.b32.xlu0 %v1136, 32
      %v1142 = vpop.permute.xlu0 %1141
      %v1145 = vadd.f32 %v1125, %v1140
      %v1146 = vadd.f32 %v1126, %v1142
      %1149 = vrot.lane.b32.xlu0 %v1145, 96
      %v1150 = vpop.permute.xlu0 %1149
      %1151 = vrot.lane.b32.xlu0 %v1146, 96
      %v1152 = vpop.permute.xlu0 %1151
      %1155 = vrot.lane.b32.xlu0 %v678, 48
      %v1156 = vpop.permute.xlu0 %1155
      %1157 = vrot.lane.b32.xlu0 %v679, 48
      %v1158 = vpop.permute.xlu0 %1157
      %v1159 = vsel %vm706, %v1150, 0
      %v1161 = vsel %vm706, %v1152, 0
      %v1163 = vsel %vm706, %v1156, 0
      %v1165 = vsel %vm706, %v1158, 0
      %1167 = vmatprep.subr.mxu0 0.0
      %1168 = vmatpush1.xpose.msra.mxu0 0.0
      %1169 = vmatprep.subr.mxu0 0.0
      %1170 = vmatpush1.xpose.msra.mxu0 0.0
      %1171 = vmatprep.subr.mxu0 0.0
      %1172 = vmatpush1.xpose.msra.mxu0 0.0
      %1173 = vmatprep.subr.mxu0 0.0
      %1174 = vmatpush1.xpose.msra.mxu0 0.0
      %1175 = vmatprep.subr.mxu0 0.0
      %1176 = vmatpush1.xpose.msra.mxu0 0.0
      %1177 = vmatprep.subr.mxu0 0.0
      %1178 = vmatpush1.xpose.msra.mxu0 0.0
      %1179 = vmatprep.subr.mxu0 0.0
      %1180 = vmatpush1.xpose.msra.mxu0 0.0
      %1181 = vmatprep.subr.mxu0 0.0
      %1182 = vmatpush1.xpose.msra.mxu0 0.0
      %1183 = vmatprep.subr.mxu0 0.0
      %1184 = vmatpush1.xpose.msra.mxu0 0.0
      %1185 = vmatprep.subr.mxu0 0.0
      %1186 = vmatpush1.xpose.msra.mxu0 0.0
      %1187 = vmatprep.subr.mxu0 0.0
      %1188 = vmatpush1.xpose.msra.mxu0 0.0
      %1189 = vmatprep.subr.mxu0 0.0
      %1190 = vmatpush1.xpose.msra.mxu0 0.0
      %1191 = vmatprep.subr.mxu0 0.0
      %1192 = vmatpush1.xpose.msra.mxu0 0.0
      %1193 = vmatprep.subr.mxu0 0.0
      %1194 = vmatpush1.xpose.msra.mxu0 0.0
      %1195 = vmatprep.subr.mxu0 0.0
      %1196 = vmatpush1.xpose.msra.mxu0 %v1165
      %1197 = vmatprep.subr.mxu0 0.0
      %1198 = vmatpush1.xpose.msra.mxu0 %v1163
      %1199 = vmatprep.subr.mxu0 0.0
      %1200 = vmatpush2.xpose.msra.mxu0 0.0
      %1201 = vmatprep.subr.mxu0 0.0
      %1202 = vmatpush2.xpose.msra.mxu0 0.0
      %1203 = vmatprep.subr.mxu0 0.0
      %1204 = vmatpush2.xpose.msra.mxu0 0.0
      %1205 = vmatprep.subr.mxu0 0.0
      %1206 = vmatpush2.xpose.msra.mxu0 0.0
      %1207 = vmatprep.subr.mxu0 0.0
      %1208 = vmatpush2.xpose.msra.mxu0 0.0
      %1209 = vmatprep.subr.mxu0 0.0
      %1210 = vmatpush2.xpose.msra.mxu0 0.0
      %1211 = vmatprep.subr.mxu0 0.0
      %1212 = vmatpush2.xpose.msra.mxu0 0.0
      %1213 = vmatprep.subr.mxu0 0.0
      %1214 = vmatpush2.xpose.msra.mxu0 0.0
      %1215 = vmatprep.subr.mxu0 0.0
      %1216 = vmatpush2.xpose.msra.mxu0 0.0
      %1217 = vmatprep.subr.mxu0 0.0
      %1218 = vmatpush2.xpose.msra.mxu0 0.0
      %1219 = vmatprep.subr.mxu0 0.0
      %1220 = vmatpush2.xpose.msra.mxu0 0.0
      %1221 = vmatprep.subr.mxu0 0.0
      %1222 = vmatpush2.xpose.msra.mxu0 0.0
      %1223 = vmatprep.subr.mxu0 0.0
      %1224 = vmatpush2.xpose.msra.mxu0 0.0
      %1225 = vmatprep.subr.mxu0 0.0
      %1226 = vmatpush2.xpose.msra.mxu0 0.0
      %1227 = vmatprep.subr.mxu0 0.0
      %1228 = vmatpush2.xpose.msra.mxu0 0.0
      %1229 = vmatprep.subr.mxu0 0.0
      %1230 = vmatpush2.xpose.msra.mxu0 0.0
      %1231 = vmatprep.mubr.f32.mxu0 0.0
      %1232 = vmatmul.mubr.f32.gmra.mxu0 %v1159
      %v1233 = vpop.f32.mrf.mxu0
      %v1234 = vadd.f32 %v611, %v1233
      %v1235 = vpop.f32.mrf.mxu0
      %1236 = vmatprep.mubr.f32.mxu0 0.0
      %1237 = vmatmul.mubr.f32.gmra.mxu0 %v1161
      %v1238 = vpop.f32.mrf.mxu0
      %v1239 = vadd.f32 %v612, %v1238
      %v1240 = vpop.f32.mrf.mxu0
      %1241 = vdwg.mxu0
      %v1242 = vsel %vm706, %v1234, -inf
      %1243 = vmax.xlane.f32.xlu0 %v1242
      %v1244 = vpop.xlane.xlu0 %1243
      %v1245 = vsel %vm706, %v1239, -inf
      %1246 = vmax.xlane.f32.xlu0 %v1245
      %v1247 = vpop.xlane.xlu0 %1246
      %v1248 = vsub.f32 %v1234, %v1244
      %v1249 = vsub.f32 %v1239, %v1247
      %v1250 = vmul.f32 %v1248, 1.442695
      %v1251 = vpow.pop %v1250
      %v1252 = vmul.f32 %v1249, 1.442695
      %v1253 = vpow.pop %v1252
      %v1254 = vsel %vm706, %v1251, 0.0
      %1255 = vadd.xlane.f32.xlu0 %v1254
      %v1256 = vpop.xlane.xlu0 %1255
      %v1257 = vsel %vm706, %v1253, 0.0
      %1258 = vadd.xlane.f32.xlu0 %v1257
      %v1259 = vpop.xlane.xlu0 %1258
      %v1260 = vrcp.pop %v1256
      %v1261 = vrcp.pop %v1259
      %v1262 = vmul.f32 %v1251, %v1260
      %v1263 = vmul.f32 %v1253, %v1261
      %1264 = vrot.lane.b32.xlu0 %v597, 16
      %v1265 = vpop.permute.xlu0 %1264
      %1266 = vrot.lane.b32.xlu0 %v600, 16
      %v1267 = vpop.permute.xlu0 %1266
      %v1271 = vsel %vm706, %v1262, 0
      %v1274 = vsel %vm706, %v1263, 0
      %1276 = vmatprep.subr.mxu0 0.0
      %1277 = vmatpush1.msra.mxu0 0.0
      %1278 = vmatprep.subr.mxu0 0.0
      %1279 = vmatpush1.msra.mxu0 0.0
      %1280 = vmatprep.subr.mxu0 0.0
      %1281 = vmatpush1.msra.mxu0 0.0
      %1282 = vmatprep.subr.mxu0 0.0
      %1283 = vmatpush1.msra.mxu0 0.0
      %1284 = vmatprep.subr.mxu0 0.0
      %1285 = vmatpush1.msra.mxu0 0.0
      %1286 = vmatprep.subr.mxu0 0.0
      %1287 = vmatpush1.msra.mxu0 0.0
      %1288 = vmatprep.subr.mxu0 0.0
      %1289 = vmatpush1.msra.mxu0 0.0
      %1290 = vmatprep.subr.mxu0 0.0
      %1291 = vmatpush1.msra.mxu0 0.0
      %1292 = vmatprep.subr.mxu0 0.0
      %1293 = vmatpush1.msra.mxu0 0.0
      %1294 = vmatprep.subr.mxu0 0.0
      %1295 = vmatpush1.msra.mxu0 0.0
      %1296 = vmatprep.subr.mxu0 0.0
      %1297 = vmatpush1.msra.mxu0 0.0
      %1298 = vmatprep.subr.mxu0 0.0
      %1299 = vmatpush1.msra.mxu0 0.0
      %1300 = vmatprep.subr.mxu0 0.0
      %1301 = vmatpush1.msra.mxu0 0.0
      %1302 = vmatprep.subr.mxu0 0.0
      %1303 = vmatpush1.msra.mxu0 0.0
      %1304 = vmatprep.subr.mxu0 0.0
      %1305 = vmatpush1.msra.mxu0 %v1267
      %1306 = vmatprep.subr.mxu0 0.0
      %1307 = vmatpush1.msra.mxu0 %v1265
      %1308 = vmatprep.subr.mxu0 0.0
      %1309 = vmatpush2.msra.mxu0 0.0
      %1310 = vmatprep.subr.mxu0 0.0
      %1311 = vmatpush2.msra.mxu0 0.0
      %1312 = vmatprep.subr.mxu0 0.0
      %1313 = vmatpush2.msra.mxu0 0.0
      %1314 = vmatprep.subr.mxu0 0.0
      %1315 = vmatpush2.msra.mxu0 0.0
      %1316 = vmatprep.subr.mxu0 0.0
      %1317 = vmatpush2.msra.mxu0 0.0
      %1318 = vmatprep.subr.mxu0 0.0
      %1319 = vmatpush2.msra.mxu0 0.0
      %1320 = vmatprep.subr.mxu0 0.0
      %1321 = vmatpush2.msra.mxu0 0.0
      %1322 = vmatprep.subr.mxu0 0.0
      %1323 = vmatpush2.msra.mxu0 0.0
      %1324 = vmatprep.subr.mxu0 0.0
      %1325 = vmatpush2.msra.mxu0 0.0
      %1326 = vmatprep.subr.mxu0 0.0
      %1327 = vmatpush2.msra.mxu0 0.0
      %1328 = vmatprep.subr.mxu0 0.0
      %1329 = vmatpush2.msra.mxu0 0.0
      %1330 = vmatprep.subr.mxu0 0.0
      %1331 = vmatpush2.msra.mxu0 0.0
      %1332 = vmatprep.subr.mxu0 0.0
      %1333 = vmatpush2.msra.mxu0 0.0
      %1334 = vmatprep.subr.mxu0 0.0
      %1335 = vmatpush2.msra.mxu0 0.0
      %1336 = vmatprep.subr.mxu0 0.0
      %1337 = vmatpush2.msra.mxu0 0.0
      %1338 = vmatprep.subr.mxu0 0.0
      %1339 = vmatpush2.msra.mxu0 0.0
      %1340 = vmatprep.mubr.f32.mxu0 0.0
      %1341 = vmatmul.mubr.f32.gmra.mxu0 %v1271
      %v1342 = vpop.f32.mrf.mxu0
      %v1343 = vadd.f32 0.0, %v1342
      %v1344 = vpop.f32.mrf.mxu0
      %1345 = vmatprep.mubr.f32.mxu0 0.0
      %1346 = vmatmul.mubr.f32.gmra.mxu0 %v1274
      %v1347 = vpop.f32.mrf.mxu0
      %v1348 = vadd.f32 0.0, %v1347
      %v1349 = vpop.f32.mrf.mxu0
      %1350 = vdwg.mxu0
      %1351 = vrot.lane.b32.xlu0 %v603, 48
      %v1352 = vpop.permute.xlu0 %1351
      %1353 = vrot.lane.b32.xlu0 %v604, 48
      %v1354 = vpop.permute.xlu0 %1353
      %v1357 = vmul.f32 %v597, %v1352
      %v1358 = vmul.f32 %v600, %v1354
      %v1359 = vsel %vm637, %v632, %v1128
      %v1360 = vsel %vm637, %v634, %v1130
      %v1361 = vmul.f32 %v1359, %v605
      %v1362 = vmul.f32 %v1360, %v606
      %1365 = vrot.lane.b32.xlu0 %v1361, 48
      %v1366 = vpop.permute.xlu0 %1365
      %1367 = vrot.lane.b32.xlu0 %v1362, 48
      %v1368 = vpop.permute.xlu0 %1367
      %v1371 = vadd.f32 %v1357, %v1366
      %v1372 = vadd.f32 %v1358, %v1368
      %1375 = vrot.lane.b32.xlu0 %v1371, 80
      %v1376 = vpop.permute.xlu0 %1375
      %1377 = vrot.lane.b32.xlu0 %v1372, 80
      %v1378 = vpop.permute.xlu0 %1377
      %v1379 = vsel %vm706, %v1376, 0
      %v1381 = vsel %vm706, %v1378, 0
      %1383 = vmatprep.subr.mxu0 0.0
      %1384 = vmatpush1.xpose.msra.mxu0 0.0
      %1385 = vmatprep.subr.mxu0 0.0
      %1386 = vmatpush1.xpose.msra.mxu0 0.0
      %1387 = vmatprep.subr.mxu0 0.0
      %1388 = vmatpush1.xpose.msra.mxu0 0.0
      %1389 = vmatprep.subr.mxu0 0.0
      %1390 = vmatpush1.xpose.msra.mxu0 0.0
      %1391 = vmatprep.subr.mxu0 0.0
      %1392 = vmatpush1.xpose.msra.mxu0 0.0
      %1393 = vmatprep.subr.mxu0 0.0
      %1394 = vmatpush1.xpose.msra.mxu0 0.0
      %1395 = vmatprep.subr.mxu0 0.0
      %1396 = vmatpush1.xpose.msra.mxu0 0.0
      %1397 = vmatprep.subr.mxu0 0.0
      %1398 = vmatpush1.xpose.msra.mxu0 0.0
      %1399 = vmatprep.subr.mxu0 0.0
      %1400 = vmatpush1.xpose.msra.mxu0 0.0
      %1401 = vmatprep.subr.mxu0 0.0
      %1402 = vmatpush1.xpose.msra.mxu0 0.0
      %1403 = vmatprep.subr.mxu0 0.0
      %1404 = vmatpush1.xpose.msra.mxu0 0.0
      %1405 = vmatprep.subr.mxu0 0.0
      %1406 = vmatpush1.xpose.msra.mxu0 0.0
      %1407 = vmatprep.subr.mxu0 0.0
      %1408 = vmatpush1.xpose.msra.mxu0 0.0
      %1409 = vmatprep.subr.mxu0 0.0
      %1410 = vmatpush1.xpose.msra.mxu0 0.0
      %1411 = vmatprep.subr.mxu0 0.0
      %1412 = vmatpush1.xpose.msra.mxu0 %v1165
      %1413 = vmatprep.subr.mxu0 0.0
      %1414 = vmatpush1.xpose.msra.mxu0 %v1163
      %1415 = vmatprep.subr.mxu0 0.0
      %1416 = vmatpush2.xpose.msra.mxu0 0.0
      %1417 = vmatprep.subr.mxu0 0.0
      %1418 = vmatpush2.xpose.msra.mxu0 0.0
      %1419 = vmatprep.subr.mxu0 0.0
      %1420 = vmatpush2.xpose.msra.mxu0 0.0
      %1421 = vmatprep.subr.mxu0 0.0
      %1422 = vmatpush2.xpose.msra.mxu0 0.0
      %1423 = vmatprep.subr.mxu0 0.0
      %1424 = vmatpush2.xpose.msra.mxu0 0.0
      %1425 = vmatprep.subr.mxu0 0.0
      %1426 = vmatpush2.xpose.msra.mxu0 0.0
      %1427 = vmatprep.subr.mxu0 0.0
      %1428 = vmatpush2.xpose.msra.mxu0 0.0
      %1429 = vmatprep.subr.mxu0 0.0
      %1430 = vmatpush2.xpose.msra.mxu0 0.0
      %1431 = vmatprep.subr.mxu0 0.0
      %1432 = vmatpush2.xpose.msra.mxu0 0.0
      %1433 = vmatprep.subr.mxu0 0.0
      %1434 = vmatpush2.xpose.msra.mxu0 0.0
      %1435 = vmatprep.subr.mxu0 0.0
      %1436 = vmatpush2.xpose.msra.mxu0 0.0
      %1437 = vmatprep.subr.mxu0 0.0
      %1438 = vmatpush2.xpose.msra.mxu0 0.0
      %1439 = vmatprep.subr.mxu0 0.0
      %1440 = vmatpush2.xpose.msra.mxu0 0.0
      %1441 = vmatprep.subr.mxu0 0.0
      %1442 = vmatpush2.xpose.msra.mxu0 0.0
      %1443 = vmatprep.subr.mxu0 0.0
      %1444 = vmatpush2.xpose.msra.mxu0 0.0
      %1445 = vmatprep.subr.mxu0 0.0
      %1446 = vmatpush2.xpose.msra.mxu0 0.0
      %1447 = vmatprep.mubr.f32.mxu0 0.0
      %1448 = vmatmul.mubr.f32.gmra.mxu0 %v1379
      %v1449 = vpop.f32.mrf.mxu0
      %v1450 = vadd.f32 %v611, %v1449
      %v1451 = vpop.f32.mrf.mxu0
      %1452 = vmatprep.mubr.f32.mxu0 0.0
      %1453 = vmatmul.mubr.f32.gmra.mxu0 %v1381
      %v1454 = vpop.f32.mrf.mxu0
      %v1455 = vadd.f32 %v612, %v1454
      %v1456 = vpop.f32.mrf.mxu0
      %1457 = vdwg.mxu0
      %v1458 = vsel %vm706, %v1450, -inf
      %1459 = vmax.xlane.f32.xlu0 %v1458
      %v1460 = vpop.xlane.xlu0 %1459
      %v1461 = vsel %vm706, %v1455, -inf
      %1462 = vmax.xlane.f32.xlu0 %v1461
      %v1463 = vpop.xlane.xlu0 %1462
      %v1464 = vsub.f32 %v1450, %v1460
      %v1465 = vsub.f32 %v1455, %v1463
      %v1466 = vmul.f32 %v1464, 1.442695
      %v1467 = vpow.pop %v1466
      %v1468 = vmul.f32 %v1465, 1.442695
      %v1469 = vpow.pop %v1468
      %v1470 = vsel %vm706, %v1467, 0.0
      %1471 = vadd.xlane.f32.xlu0 %v1470
      %v1472 = vpop.xlane.xlu0 %1471
      %v1473 = vsel %vm706, %v1469, 0.0
      %1474 = vadd.xlane.f32.xlu0 %v1473
      %v1475 = vpop.xlane.xlu0 %1474
      %v1476 = vrcp.pop %v1472
      %v1477 = vrcp.pop %v1475
      %v1478 = vmul.f32 %v1467, %v1476
      %v1479 = vmul.f32 %v1469, %v1477
      %v1481 = vsel %vm706, %v1478, 0
      %v1484 = vsel %vm706, %v1479, 0
      %1486 = vmatprep.subr.mxu0 0.0
      %1487 = vmatpush1.msra.mxu0 0.0
      %1488 = vmatprep.subr.mxu0 0.0
      %1489 = vmatpush1.msra.mxu0 0.0
      %1490 = vmatprep.subr.mxu0 0.0
      %1491 = vmatpush1.msra.mxu0 0.0
      %1492 = vmatprep.subr.mxu0 0.0
      %1493 = vmatpush1.msra.mxu0 0.0
      %1494 = vmatprep.subr.mxu0 0.0
      %1495 = vmatpush1.msra.mxu0 0.0
      %1496 = vmatprep.subr.mxu0 0.0
      %1497 = vmatpush1.msra.mxu0 0.0
      %1498 = vmatprep.subr.mxu0 0.0
      %1499 = vmatpush1.msra.mxu0 0.0
      %1500 = vmatprep.subr.mxu0 0.0
      %1501 = vmatpush1.msra.mxu0 0.0
      %1502 = vmatprep.subr.mxu0 0.0
      %1503 = vmatpush1.msra.mxu0 0.0
      %1504 = vmatprep.subr.mxu0 0.0
      %1505 = vmatpush1.msra.mxu0 0.0
      %1506 = vmatprep.subr.mxu0 0.0
      %1507 = vmatpush1.msra.mxu0 0.0
      %1508 = vmatprep.subr.mxu0 0.0
      %1509 = vmatpush1.msra.mxu0 0.0
      %1510 = vmatprep.subr.mxu0 0.0
      %1511 = vmatpush1.msra.mxu0 0.0
      %1512 = vmatprep.subr.mxu0 0.0
      %1513 = vmatpush1.msra.mxu0 0.0
      %1514 = vmatprep.subr.mxu0 0.0
      %1515 = vmatpush1.msra.mxu0 %v1267
      %1516 = vmatprep.subr.mxu0 0.0
      %1517 = vmatpush1.msra.mxu0 %v1265
      %1518 = vmatprep.subr.mxu0 0.0
      %1519 = vmatpush2.msra.mxu0 0.0
      %1520 = vmatprep.subr.mxu0 0.0
      %1521 = vmatpush2.msra.mxu0 0.0
      %1522 = vmatprep.subr.mxu0 0.0
      %1523 = vmatpush2.msra.mxu0 0.0
      %1524 = vmatprep.subr.mxu0 0.0
      %1525 = vmatpush2.msra.mxu0 0.0
      %1526 = vmatprep.subr.mxu0 0.0
      %1527 = vmatpush2.msra.mxu0 0.0
      %1528 = vmatprep.subr.mxu0 0.0
      %1529 = vmatpush2.msra.mxu0 0.0
      %1530 = vmatprep.subr.mxu0 0.0
      %1531 = vmatpush2.msra.mxu0 0.0
      %1532 = vmatprep.subr.mxu0 0.0
      %1533 = vmatpush2.msra.mxu0 0.0
      %1534 = vmatprep.subr.mxu0 0.0
      %1535 = vmatpush2.msra.mxu0 0.0
      %1536 = vmatprep.subr.mxu0 0.0
      %1537 = vmatpush2.msra.mxu0 0.0
      %1538 = vmatprep.subr.mxu0 0.0
      %1539 = vmatpush2.msra.mxu0 0.0
      %1540 = vmatprep.subr.mxu0 0.0
      %1541 = vmatpush2.msra.mxu0 0.0
      %1542 = vmatprep.subr.mxu0 0.0
      %1543 = vmatpush2.msra.mxu0 0.0
      %1544 = vmatprep.subr.mxu0 0.0
      %1545 = vmatpush2.msra.mxu0 0.0
      %1546 = vmatprep.subr.mxu0 0.0
      %1547 = vmatpush2.msra.mxu0 0.0
      %1548 = vmatprep.subr.mxu0 0.0
      %1549 = vmatpush2.msra.mxu0 0.0
      %1550 = vmatprep.mubr.f32.mxu0 0.0
      %1551 = vmatmul.mubr.f32.gmra.mxu0 %v1481
      %v1552 = vpop.f32.mrf.mxu0
      %v1553 = vadd.f32 0.0, %v1552
      %v1554 = vpop.f32.mrf.mxu0
      %1555 = vmatprep.mubr.f32.mxu0 0.0
      %1556 = vmatmul.mubr.f32.gmra.mxu0 %v1484
      %v1557 = vpop.f32.mrf.mxu0
      %v1558 = vadd.f32 0.0, %v1557
      %v1559 = vpop.f32.mrf.mxu0
      %1560 = vdwg.mxu0
      %1563 = vrot.lane.b32.xlu0 %v1111, 16
      %v1564 = vpop.permute.xlu0 %1563
      %1565 = vrot.lane.b32.xlu0 %v1116, 16
      %v1566 = vpop.permute.xlu0 %1565
      %1571 = vrot.lane.b32.xlu0 %v1343, 32
      %v1572 = vpop.permute.xlu0 %1571
      %1573 = vrot.lane.b32.xlu0 %v1348, 32
      %v1574 = vpop.permute.xlu0 %1573
      %1579 = vrot.lane.b32.xlu0 %v1553, 48
      %v1580 = vpop.permute.xlu0 %1579
      %1581 = vrot.lane.b32.xlu0 %v1558, 48
      %v1582 = vpop.permute.xlu0 %1581
      %v1585 = vsel %vm706, %v893, %v1564
      %v1586 = vsel %vm706, %v898, %v1566
      %vm1587 = vcmask 261120
      %v1588 = vsel %vm1587, %v1585, %v1572
      %v1589 = vsel %vm1587, %v1586, %v1574
      %vm1590 = vcmask 392192
      %v1591 = vsel %vm1590, %v1588, %v1580
      %v1592 = vsel %vm1590, %v1589, %v1582
      %v1593 = vpack.c.bf16 %v1592, %v1591
      %v1594 = vld [vmem:[%s473] sm:$0xf]
      %v1595 = vld [vmem:[%s473 + $0x4] sm:$0xf]
      %v1596 = vld [vmem:[%s473 + $0x8] sm:$0xf]
      %v1597 = vld [vmem:[%s473 + $0xc] sm:$0xf]
      %v1598 = vld [vmem:[%s473 + $0x10] sm:$0xf]
      %v1599 = vld [vmem:[%s473 + $0x14] sm:$0xf]
      %v1600 = vld [vmem:[%s473 + $0x18] sm:$0xf]
      %v1601 = vld [vmem:[%s473 + $0x1c] sm:$0xf]
      %v1610 = vunpack.c.l.b16 %v1594
      %v1611 = vunpack.c.l.b16 %v1595
      %v1612 = vunpack.c.l.b16 %v1596
      %v1613 = vunpack.c.l.b16 %v1597
      %v1614 = vunpack.c.l.b16 %v1598
      %v1615 = vunpack.c.l.b16 %v1599
      %v1616 = vunpack.c.l.b16 %v1600
      %v1617 = vunpack.c.l.b16 %v1601
      %v1618 = vpack.c.b16 %v1611, %v1610
      %v1619 = vpack.c.b16 %v1613, %v1612
      %v1620 = vpack.c.b16 %v1615, %v1614
      %v1621 = vpack.c.b16 %v1617, %v1616
      %v1627 = vsel %vm501, %v1593, 0
      %1629 = vmatprep.subr.bf16.mxu0 0
      %1630 = vmatpush1.bf16.msra.mxu0 0
      %1631 = vmatprep.subr.bf16.mxu0 0
      %1632 = vmatpush1.bf16.msra.mxu0 0
      %1633 = vmatprep.subr.bf16.mxu0 0
      %1634 = vmatpush1.bf16.msra.mxu0 0
      %1635 = vmatprep.subr.bf16.mxu0 0
      %1636 = vmatpush1.bf16.msra.mxu0 0
      %1637 = vmatprep.subr.bf16.mxu0 0
      %1638 = vmatpush1.bf16.msra.mxu0 %v1621
      %1639 = vmatprep.subr.bf16.mxu0 0
      %1640 = vmatpush1.bf16.msra.mxu0 %v1620
      %1641 = vmatprep.subr.bf16.mxu0 0
      %1642 = vmatpush1.bf16.msra.mxu0 %v1619
      %1643 = vmatprep.subr.bf16.mxu0 0
      %1644 = vmatpush1.bf16.msra.mxu0 %v1618
      %1645 = vmatprep.subr.bf16.mxu0 0
      %1646 = vmatpush2.bf16.msra.mxu0 0
      %1647 = vmatprep.subr.bf16.mxu0 0
      %1648 = vmatpush2.bf16.msra.mxu0 0
      %1649 = vmatprep.subr.bf16.mxu0 0
      %1650 = vmatpush2.bf16.msra.mxu0 0
      %1651 = vmatprep.subr.bf16.mxu0 0
      %1652 = vmatpush2.bf16.msra.mxu0 0
      %1653 = vmatprep.subr.bf16.mxu0 0
      %1654 = vmatpush2.bf16.msra.mxu0 0
      %1655 = vmatprep.subr.bf16.mxu0 0
      %1656 = vmatpush2.bf16.msra.mxu0 0
      %1657 = vmatprep.subr.bf16.mxu0 0
      %1658 = vmatpush2.bf16.msra.mxu0 0
      %1659 = vmatprep.subr.bf16.mxu0 0
      %1660 = vmatpush2.bf16.msra.mxu0 0
      %1661 = vmatprep.mubr.bf16.mxu0 0
      %1662 = vmatmul.mubr.bf16.gmra.mxu0 %v1627
      %v1663 = vpop.f32.mrf.mxu0
      %v1664 = vadd.f32 0.0, %v1663
      %v1665 = vpop.f32.mrf.mxu0
      %v1666 = vpop.f32.mrf.mxu0
      %v1667 = vadd.f32 0.0, %v1666
      %v1668 = vpop.f32.mrf.mxu0
      %1669 = vdwg.mxu0
      %v1670 = vadd.f32 %v497, %v1664
      %v1671 = vadd.f32 %v498, %v1667
      %v1672 = vmul.f32 %v1670, %v1670
      %v1673 = vmul.f32 %v1671, %v1671
      %v1674 = vsel %vm501, %v1672, 0.0
      %1675 = vadd.xlane.f32.xlu0 %v1674
      %v1676 = vpop.xlane.xlu0 %1675
      %v1677 = vsel %vm501, %v1673, 0.0
      %1678 = vadd.xlane.f32.xlu0 %v1677
      %v1679 = vpop.xlane.xlu0 %1678
      %v1680 = vmul.f32 %v1676, %v508
      %v1681 = vmul.f32 %v1679, %v508
      %v1682 = vadd.f32 %v1680, 1e-06
      %v1683 = vadd.f32 %v1681, 1e-06
      %v1684 = vrsqrt.pop %v1682
      %v1685 = vrsqrt.pop %v1683
      %v1686 = vmul.f32 %v1670, %v1684
      %v1687 = vmul.f32 %v1671, %v1685
      %v1688 = vld [vmem:[%s476] sm:$0x1]
      %v1690 = vlaneseq
      %v1691 = vshrl.u32 %v1690, 7
      %v1692 = vsub.s32 0, %v1691
      %v1693 = vrot.slane %v1688, %v1692
      %v1695 = vmul.f32 %v1686, %v1693
      %v1696 = vmul.f32 %v1687, %v1693
      %v1697 = vpack.c.bf16 %v1696, %v1695
      %v1698 = vld [vmem:[%s481] sm:$0xff]
      %v1699 = vld [vmem:[%s481 + $0x8] sm:$0xff]
      %v1700 = vld [vmem:[%s481 + $0x10] sm:$0xff]
      %v1701 = vld [vmem:[%s481 + $0x18] sm:$0xff]
      %v1702 = vld [vmem:[%s481 + $0x20] sm:$0xff]
      %v1703 = vld [vmem:[%s481 + $0x28] sm:$0xff]
      %v1704 = vld [vmem:[%s481 + $0x30] sm:$0xff]
      %v1705 = vld [vmem:[%s481 + $0x38] sm:$0xff]
      %v1714 = vunpack.c.l.b16 %v1698
      %v1715 = vunpack.c.h.b16 %v1698
      %v1716 = vunpack.c.l.b16 %v1699
      %v1717 = vunpack.c.h.b16 %v1699
      %v1718 = vunpack.c.l.b16 %v1700
      %v1719 = vunpack.c.h.b16 %v1700
      %v1720 = vunpack.c.l.b16 %v1701
      %v1721 = vunpack.c.h.b16 %v1701
      %v1722 = vunpack.c.l.b16 %v1702
      %v1723 = vunpack.c.h.b16 %v1702
      %v1724 = vunpack.c.l.b16 %v1703
      %v1725 = vunpack.c.h.b16 %v1703
      %v1726 = vunpack.c.l.b16 %v1704
      %v1727 = vunpack.c.h.b16 %v1704
      %v1728 = vunpack.c.l.b16 %v1705
      %v1729 = vunpack.c.h.b16 %v1705
      %v1730 = vpack.c.b16 %v1716, %v1714
      %v1731 = vpack.c.b16 %v1717, %v1715
      %v1732 = vpack.c.b16 %v1720, %v1718
      %v1733 = vpack.c.b16 %v1721, %v1719
      %v1734 = vpack.c.b16 %v1724, %v1722
      %v1735 = vpack.c.b16 %v1725, %v1723
      %v1736 = vpack.c.b16 %v1728, %v1726
      %v1737 = vpack.c.b16 %v1729, %v1727
      %v1747 = vsel %vm501, %v1697, 0
      %1749 = vmatprep.subr.bf16.mxu0 0
      %1750 = vmatpush1.bf16.msra.mxu0 0
      %1751 = vmatprep.subr.bf16.mxu0 0
      %1752 = vmatpush1.bf16.msra.mxu0 0
      %1753 = vmatprep.subr.bf16.mxu0 0
      %1754 = vmatpush1.bf16.msra.mxu0 0
      %1755 = vmatprep.subr.bf16.mxu0 0
      %1756 = vmatpush1.bf16.msra.mxu0 0
      %1757 = vmatprep.subr.bf16.mxu0 %v1737
      %1758 = vmatpush1.bf16.msra.mxu0 %v1736
      %1759 = vmatprep.subr.bf16.mxu0 %v1735
      %1760 = vmatpush1.bf16.msra.mxu0 %v1734
      %1761 = vmatprep.subr.bf16.mxu0 %v1733
      %1762 = vmatpush1.bf16.msra.mxu0 %v1732
      %1763 = vmatprep.subr.bf16.mxu0 %v1731
      %1764 = vmatpush1.bf16.msra.mxu0 %v1730
      %1765 = vmatprep.subr.bf16.mxu0 0
      %1766 = vmatpush2.bf16.msra.mxu0 0
      %1767 = vmatprep.subr.bf16.mxu0 0
      %1768 = vmatpush2.bf16.msra.mxu0 0
      %1769 = vmatprep.subr.bf16.mxu0 0
      %1770 = vmatpush2.bf16.msra.mxu0 0
      %1771 = vmatprep.subr.bf16.mxu0 0
      %1772 = vmatpush2.bf16.msra.mxu0 0
      %1773 = vmatprep.subr.bf16.mxu0 0
      %1774 = vmatpush2.bf16.msra.mxu0 0
      %1775 = vmatprep.subr.bf16.mxu0 0
      %1776 = vmatpush2.bf16.msra.mxu0 0
      %1777 = vmatprep.subr.bf16.mxu0 0
      %1778 = vmatpush2.bf16.msra.mxu0 0
      %1779 = vmatprep.subr.bf16.mxu0 0
      %1780 = vmatpush2.bf16.msra.mxu0 0
      %1781 = vmatprep.mubr.bf16.mxu0 0
      %1782 = vmatmul.mubr.bf16.gmra.mxu0 %v1747
      %v1783 = vpop.f32.mrf.mxu0
      %v1784 = vadd.f32 0.0, %v1783
      %v1785 = vpop.f32.mrf.mxu0
      %v1786 = vadd.f32 0.0, %v1785
      %v1787 = vpop.f32.mrf.mxu0
      %v1788 = vadd.f32 0.0, %v1787
      %v1789 = vpop.f32.mrf.mxu0
      %v1790 = vadd.f32 0.0, %v1789
      %1791 = vdwg.mxu0
      %v1792 = vxor.u32 %v1784, 2147483648
      %v1793 = vxor.u32 %v1788, 2147483648
      %v1794 = vmul.f32 %v1792, 1.442695
      %v1795 = vpow.pop %v1794
      %v1796 = vmul.f32 %v1793, 1.442695
      %v1797 = vpow.pop %v1796
      %v1798 = vadd.f32 %v1795, 1.0
      %v1799 = vadd.f32 %v1797, 1.0
      %v1800 = vrcp.pop %v1798
      %v1801 = vmul.f32 1.0, %v1800
      %v1802 = vrcp.pop %v1799
      %v1803 = vmul.f32 1.0, %v1802
      %v1804 = vmul.f32 %v1784, %v1801
      %v1805 = vmul.f32 %v1788, %v1803
      %v1806 = vmul.f32 %v1804, %v1786
      %v1807 = vmul.f32 %v1805, %v1790
      %v1808 = vpack.c.bf16 %v1807, %v1806
      %v1809 = vld [vmem:[%s486] sm:$0xf]
      %v1810 = vld [vmem:[%s486 + $0x4] sm:$0xf]
      %v1811 = vld [vmem:[%s486 + $0x8] sm:$0xf]
      %v1812 = vld [vmem:[%s486 + $0xc] sm:$0xf]
      %v1813 = vld [vmem:[%s486 + $0x10] sm:$0xf]
      %v1814 = vld [vmem:[%s486 + $0x14] sm:$0xf]
      %v1815 = vld [vmem:[%s486 + $0x18] sm:$0xf]
      %v1816 = vld [vmem:[%s486 + $0x1c] sm:$0xf]
      %v1817 = vld [vmem:[%s486 + $0x20] sm:$0xf]
      %v1818 = vld [vmem:[%s486 + $0x24] sm:$0xf]
      %v1819 = vld [vmem:[%s486 + $0x28] sm:$0xf]
      %v1820 = vld [vmem:[%s486 + $0x2c] sm:$0xf]
      %v1821 = vld [vmem:[%s486 + $0x30] sm:$0xf]
      %v1822 = vld [vmem:[%s486 + $0x34] sm:$0xf]
      %v1823 = vld [vmem:[%s486 + $0x38] sm:$0xf]
      %v1824 = vld [vmem:[%s486 + $0x3c] sm:$0xf]
      %v1841 = vunpack.c.l.b16 %v1809
      %v1842 = vunpack.c.l.b16 %v1810
      %v1843 = vunpack.c.l.b16 %v1811
      %v1844 = vunpack.c.l.b16 %v1812
      %v1845 = vunpack.c.l.b16 %v1813
      %v1846 = vunpack.c.l.b16 %v1814
      %v1847 = vunpack.c.l.b16 %v1815
      %v1848 = vunpack.c.l.b16 %v1816
      %v1849 = vunpack.c.l.b16 %v1817
      %v1850 = vunpack.c.l.b16 %v1818
      %v1851 = vunpack.c.l.b16 %v1819
      %v1852 = vunpack.c.l.b16 %v1820
      %v1853 = vunpack.c.l.b16 %v1821
      %v1854 = vunpack.c.l.b16 %v1822
      %v1855 = vunpack.c.l.b16 %v1823
      %v1856 = vunpack.c.l.b16 %v1824
      %v1857 = vpack.c.b16 %v1842, %v1841
      %v1858 = vpack.c.b16 %v1844, %v1843
      %v1859 = vpack.c.b16 %v1846, %v1845
      %v1860 = vpack.c.b16 %v1848, %v1847
      %v1861 = vpack.c.b16 %v1850, %v1849
      %v1862 = vpack.c.b16 %v1852, %v1851
      %v1863 = vpack.c.b16 %v1854, %v1853
      %v1864 = vpack.c.b16 %v1856, %v1855
      %1873 = vmatprep.subr.bf16.mxu0 0
      %1874 = vmatpush1.bf16.msra.mxu0 %v1864
      %1875 = vmatprep.subr.bf16.mxu0 0
      %1876 = vmatpush1.bf16.msra.mxu0 %v1863
      %1877 = vmatprep.subr.bf16.mxu0 0
      %1878 = vmatpush1.bf16.msra.mxu0 %v1862
      %1879 = vmatprep.subr.bf16.mxu0 0
      %1880 = vmatpush1.bf16.msra.mxu0 %v1861
      %1881 = vmatprep.subr.bf16.mxu0 0
      %1882 = vmatpush1.bf16.msra.mxu0 %v1860
      %1883 = vmatprep.subr.bf16.mxu0 0
      %1884 = vmatpush1.bf16.msra.mxu0 %v1859
      %1885 = vmatprep.subr.bf16.mxu0 0
      %1886 = vmatpush1.bf16.msra.mxu0 %v1858
      %1887 = vmatprep.subr.bf16.mxu0 0
      %1888 = vmatpush1.bf16.msra.mxu0 %v1857
      %1889 = vmatprep.subr.bf16.mxu0 0
      %1890 = vmatpush2.bf16.msra.mxu0 0
      %1891 = vmatprep.subr.bf16.mxu0 0
      %1892 = vmatpush2.bf16.msra.mxu0 0
      %1893 = vmatprep.subr.bf16.mxu0 0
      %1894 = vmatpush2.bf16.msra.mxu0 0
      %1895 = vmatprep.subr.bf16.mxu0 0
      %1896 = vmatpush2.bf16.msra.mxu0 0
      %1897 = vmatprep.subr.bf16.mxu0 0
      %1898 = vmatpush2.bf16.msra.mxu0 0
      %1899 = vmatprep.subr.bf16.mxu0 0
      %1900 = vmatpush2.bf16.msra.mxu0 0
      %1901 = vmatprep.subr.bf16.mxu0 0
      %1902 = vmatpush2.bf16.msra.mxu0 0
      %1903 = vmatprep.subr.bf16.mxu0 0
      %1904 = vmatpush2.bf16.msra.mxu0 0
      %1905 = vmatprep.mubr.bf16.mxu0 0
      %1906 = vmatmul.mubr.bf16.gmra.mxu0 %v1808
      %v1907 = vpop.f32.mrf.mxu0
      %v1908 = vadd.f32 0.0, %v1907
      %v1909 = vpop.f32.mrf.mxu0
      %v1910 = vpop.f32.mrf.mxu0
      %v1911 = vadd.f32 0.0, %v1910
      %v1912 = vpop.f32.mrf.mxu0
      %1913 = vdwg.mxu0
      %v1914 = vadd.f32 %v1670, %v1908
      %v1915 = vadd.f32 %v1671, %v1911
      %1916 = vst.msk [vmem:[#allocation2] sm:$0xff] %vm501, %v1914
      %1917 = vst.msk [vmem:[#allocation2 + $0x8] sm:$0xff] %vm501, %v1915
      %1918 = vst.msk [vmem:[%s12] sm:$0xff] %vm501, %v1914
      %1919 = vst.msk [vmem:[%s12 + $0x8] sm:$0xff] %vm501, %v1915
      // Predicated region
      $region73: #{run.2} parent=67 // pred_check
        %p1920 = pneg %p318
      $region74: #{run.2} parent=67 // pred_check_branch
        %1922 = sbr.rel (%p1920) target = $region76
      $region75: #{run.2} parent=67 // pred_region
        _
      $region76: #{run.2} parent=67 // pred_fallthru
        _
      // Predicated region
      $region77: #{run.2} parent=67 // pred_check
        %p1923 = pneg %p318
      $region78: #{run.2} parent=67 // pred_check_branch
        %1925 = sbr.rel (%p1923) target = $region80
      $region79: #{run.2} parent=67 // pred_region
        _
      $region80: #{run.2} parent=67 // pred_fallthru
        _
    $region68: #{run.2} parent=5 // pred_fallthru
      _
    %p1926 = scmp.le.s32.totalorder 2, %s18
    // Predicated region
    $region81: #{run.2} parent=5 // pred_check
      %p1927 = pneg %p1926
    $region82: #{run.2} parent=5 // pred_check_branch
      %1929 = sbr.rel (%p1927) target = $region84
    $region83: #{run.2} parent=5 // pred_region
      %s1930 = ssub.s32 %s18, 2
    $region84: #{run.2} parent=5 // pred_fallthru
      _
  $region6: #{run.2} parent=0 // loop_footer
    %s22 = sadd.s32 1, %s18
  $region7: #{run.2} parent=0 // loop_footer_branch
    %17 = sbr.rel target = $region3
  $region8: #{run.2} parent=0 // loop_exit
    _

</llo_original>
